<compile_context>
chip_gen: v7x
topology: tpu7x:2x2x1
jax: 0.10.0
libtpu: 0.0.40
codegen_flags: <defaults>
</compile_context>

<pallas_src>
import functools

import jax
import jax.numpy as jnp
import numpy as np
from jax.experimental import pallas as pl
from jax.experimental.pallas import tpu as pltpu

_BN_EPS = 1e-5
_SLAB_LANES = 512      # widest layer output; every weight padded to this lane width
_CLS_PAD = 128         # lane-dense classifier output width (real width = 2)


def _round_up(v, m):
    return (v + m - 1) // m * m


# ----------------------------------------------------------------------------
# Fused whole-network kernel: encoder + decoder + (BN-folded) classifier
# ----------------------------------------------------------------------------
def _ae_kernel(meta, x_ref, w_ref, b_ref, dex_ref, cls_ref):
    """meta: static tuple of (row_offset, in_dim, out_dim) per layer (16 layers).

    w_ref: (total_rows, 512) bf16 weight slab (resident in VMEM).
    b_ref: (16, 512) f32 bias slab (resident in VMEM).
    """

    def dense(h, idx, act):
        off, din, dout = meta[idx]
        w = w_ref[off:off + din, :dout]                        # bf16 (din, dout)
        b = b_ref[idx:idx + 1, :dout]                          # f32  (1, dout)
        y = jnp.dot(h.astype(jnp.bfloat16), w,
                    preferred_element_type=jnp.float32) + b    # f32 accumulate
        if act:
            y = jnp.maximum(y, 0.2 * y)                        # LeakyReLU(0.2)
        return y

    h = x_ref[...].astype(jnp.float32)

    # encoder: layers 0..5, all LeakyReLU (Dropout = identity at inference)
    for i in range(6):
        h = dense(h, i, act=True)
    enx = h

    # decoder: layers 6..11, LeakyReLU except the last
    d = enx
    for i in range(6, 12):
        d = dense(d, i, act=(i != 11))
    dex_ref[...] = d.astype(dex_ref.dtype)

    # classifier: layers 12..15 (BN folded), LeakyReLU except last, 128-lane padded
    c = enx
    for i in range(12, 16):
        c = dense(c, i, act=(i != 15))
    cls_ref[...] = c.astype(cls_ref.dtype)


def _choose_batch_tile(B, tb_max=512):
    """Right-size the batch tile: minimal padding waste, <=512 rows, and >=2
    grid steps when the batch allows (v7x megacore sharding)."""
    n_tiles = max(1, -(-B // tb_max))
    if n_tiles == 1 and B > 8:
        n_tiles = 2
    tb = _round_up(-(-B // n_tiles), 8)          # sublane-aligned
    return tb, n_tiles * tb


def _ae_pallas(x_flat, layers):
    """x_flat: (B, n*n) f32; layers: list of 16 (w (in,out), b (out,)) f32 tuples."""
    B, D = x_flat.shape
    TB, B_pad = _choose_batch_tile(B)
    if B_pad != B:
        x_flat = jnp.pad(x_flat, ((0, B_pad - B), (0, 0)))

    # ---- pack all weights into one bf16 slab, all biases into one f32 slab ----
    meta = []
    off = 0
    n_layers = len(layers)
    for li, (w, _) in enumerate(layers):
        dout = w.shape[1] if li != n_layers - 1 else _CLS_PAD   # lane-dense cls out
        meta.append((off, w.shape[0], dout))
        off += w.shape[0]

    w_slab = jnp.concatenate(
        [jnp.pad(w, ((0, 0), (0, _SLAB_LANES - w.shape[1]))) for w, _ in layers],
        axis=0).astype(jnp.bfloat16)                            # (total_rows, 512)
    b_slab = jnp.stack(
        [jnp.pad(b, (0, _SLAB_LANES - b.shape[0])) for _, b in layers],
        axis=0).astype(jnp.float32)                             # (16, 512)

    n_out = layers[11][0].shape[1]                              # decoder width == n*n

    flops = 2 * B_pad * sum(din * dout for _, din, dout in meta)
    bytes_accessed = (w_slab.size * 2 + b_slab.size * 4
                      + B_pad * D * 4 + B_pad * n_out * 4 + B_pad * _CLS_PAD * 4)

    dex, cls = pl.pallas_call(
        functools.partial(_ae_kernel, tuple(meta)),
        out_shape=(
            jax.ShapeDtypeStruct((B_pad, n_out), jnp.float32),
            jax.ShapeDtypeStruct((B_pad, _CLS_PAD), jnp.float32),
        ),
        grid_spec=pltpu.PrefetchScalarGridSpec(
            num_scalar_prefetch=0,
            grid=(B_pad // TB,),
            in_specs=[
                pl.BlockSpec((TB, D), lambda i: (i, 0)),
                pl.BlockSpec(w_slab.shape, lambda i: (0, 0)),   # resident weight slab
                pl.BlockSpec(b_slab.shape, lambda i: (0, 0)),   # resident bias slab
            ],
            out_specs=(
                pl.BlockSpec((TB, n_out), lambda i: (i, 0)),
                pl.BlockSpec((TB, _CLS_PAD), lambda i: (i, 0)),
            ),
        ),
        compiler_params=pltpu.CompilerParams(
            dimension_semantics=("parallel",),
            vmem_limit_bytes=32 * 1024 * 1024),
        cost_estimate=pl.CostEstimate(
            flops=flops, transcendentals=0, bytes_accessed=bytes_accessed),
    )(x_flat, w_slab, b_slab)

    if B_pad != B:                       # avoid extra copies when no padding
        dex = dex[:B]
        cls = cls[:B]
    return dex, cls[:, :2]


# ----------------------------------------------------------------------------
# Parameters + forward
# ----------------------------------------------------------------------------
def _linear_init(key, fan_in, fan_out):
    kw, kb = jax.random.split(key)
    bound = 1.0 / float(np.sqrt(fan_in))
    w = jax.random.uniform(kw, (fan_in, fan_out), jnp.float32, -bound, bound)
    b = jax.random.uniform(kb, (fan_out,), jnp.float32, -bound, bound)
    return w, b


def init_params(key, n):
    enc_dims = [n * n, 512, 256, 128, 64, 32, 16]
    dec_dims = [16, 32, 64, 128, 256, 512, n * n]
    cls_dims = [16, 256, 128, 64, 2]
    keys = iter(jax.random.split(key, 32))

    def make_chain(dims):
        ws, bs = [], []
        for din, dout in zip(dims[:-1], dims[1:]):
            w, b = _linear_init(next(keys), din, dout)
            ws.append(w)
            bs.append(b)
        return ws, bs

    enc_w, enc_b = make_chain(enc_dims)
    dec_w, dec_b = make_chain(dec_dims)
    cls_w, cls_b = make_chain(cls_dims)

    bn_gamma, bn_beta, bn_mean, bn_var = [], [], [], []
    for dim in (256, 128, 64):
        k1, k2, k3, k4 = jax.random.split(next(keys), 4)
        bn_gamma.append(jax.random.uniform(k1, (dim,), jnp.float32, 0.5, 1.5))
        bn_beta.append(jax.random.normal(k2, (dim,), jnp.float32) * 0.1)
        bn_mean.append(jax.random.normal(k3, (dim,), jnp.float32) * 0.1)
        bn_var.append(jax.random.uniform(k4, (dim,), jnp.float32, 0.5, 1.5))

    return {
        "enc_w": enc_w, "enc_b": enc_b,
        "dec_w": dec_w, "dec_b": dec_b,
        "cls_w": cls_w, "cls_b": cls_b,
        "bn_gamma": bn_gamma, "bn_beta": bn_beta,
        "bn_mean": bn_mean, "bn_var": bn_var,
    }


def _fold_bn(w, b, gamma, beta, mean, var):
    # BN(W x + b) == (W * scale) x + (scale * (b - mean) + beta)
    scale = gamma / jnp.sqrt(var + _BN_EPS)
    return w * scale[None, :], (b - mean) * scale + beta


@jax.jit
def autoencoder_forward(params, x_nchw):
    B = x_nchw.shape[0]
    n = x_nchw.shape[-1]
    xf = x_nchw.reshape(B, -1)                    # == torch x.view(B, -1)

    layers = []
    for w, b in zip(params["enc_w"], params["enc_b"]):
        layers.append((w, b))
    for w, b in zip(params["dec_w"], params["dec_b"]):
        layers.append((w, b))
    for i in range(3):                            # classifier linears with BN folded
        layers.append(_fold_bn(params["cls_w"][i], params["cls_b"][i],
                               params["bn_gamma"][i], params["bn_beta"][i],
                               params["bn_mean"][i], params["bn_var"][i]))
    layers.append((params["cls_w"][3], params["cls_b"][3]))

    dex, cls = _ae_pallas(xf, layers)
    return dex.reshape(B, 1, n, n), cls


def autoencoder_reference(params, x_nchw):
    """Pure-JAX reference mirroring the PyTorch eval-mode forward (f32)."""
    B = x_nchw.shape[0]
    n = x_nchw.shape[-1]

    def lrelu(v):
        return jnp.where(v >= 0, v, 0.2 * v)

    h = x_nchw.reshape(B, -1)
    for w, b in zip(params["enc_w"], params["enc_b"]):
        h = lrelu(h @ w + b)
    enx = h

    d = enx
    dec = list(zip(params["dec_w"], params["dec_b"]))
    for i, (w, b) in enumerate(dec):
        d = d @ w + b
        if i != len(dec) - 1:
            d = lrelu(d)

    c = enx
    for i in range(3):
        c = c @ params["cls_w"][i] + params["cls_b"][i]
        c = (c - params["bn_mean"][i]) / jnp.sqrt(params["bn_var"][i] + _BN_EPS)
        c = c * params["bn_gamma"][i] + params["bn_beta"][i]
        c = lrelu(c)
    c = c @ params["cls_w"][3] + params["cls_b"][3]

    return d.reshape(B, 1, n, n), c


if __name__ == "__main__":
    n = 16                                        # n*n = 256 input features
    key = jax.random.PRNGKey(0)
    kp, kx = jax.random.split(key)
    params = init_params(kp, n)

    # B=2 exercises the single-tile path; B=20 exercises batch padding + a
    # multi-step "parallel" grid (2 tiles).
    for B in (2, 20):
        x = jax.random.normal(jax.random.fold_in(kx, B), (B, 1, n, n), jnp.float32)

        outde, cls = jax.block_until_ready(autoencoder_forward(params, x))
        assert outde.shape == (B, 1, n, n) and outde.dtype == jnp.float32
        assert cls.shape == (B, 2) and cls.dtype == jnp.float32

        ref_de, ref_cls = jax.block_until_ready(autoencoder_reference(params, x))
        # bf16 MXU operands vs f32 reference: activations here are O(0.01-1), so
        # 2e-2 abs/rel tolerance comfortably covers the bf16 rounding path.
        np.testing.assert_allclose(np.asarray(outde), np.asarray(ref_de),
                                   rtol=2e-2, atol=2e-2)
        np.testing.assert_allclose(np.asarray(cls), np.asarray(ref_cls),
                                   rtol=2e-2, atol=2e-2)

    print("KERNEL_OK")
</pallas_src>

<mosaic_0001>
module attributes {stable_mosaic.version = 11 : i64} {
  func.func @_ae_kernel(%arg0: i32, %arg1: memref<8x256xf32, #tpu.memory_space<vmem>>, %arg2: memref<2720x512xbf16, #tpu.memory_space<vmem>>, %arg3: memref<16x512xf32, #tpu.memory_space<vmem>>, %arg4: memref<8x256xf32, #tpu.memory_space<vmem>>, %arg5: memref<8x128xf32, #tpu.memory_space<vmem>>) attributes {dimension_semantics = [#tpu.dimension_semantics<parallel>], iteration_bounds = array<i64: 1>, scalar_prefetch = 0 : i64, scratch_operands = 0 : i64, tpu.core_type = #tpu.core_type<tc>, window_params = [{transform_indices = @transform_0, window_bounds = array<i64: 8, 256>}, {pipeline_mode = #tpu.pipeline_mode<synchronous>, transform_indices = @transform_1, window_bounds = array<i64: 2720, 512>}, {pipeline_mode = #tpu.pipeline_mode<synchronous>, transform_indices = @transform_2, window_bounds = array<i64: 16, 512>}, {transform_indices = @transform_3, window_bounds = array<i64: 8, 256>}, {transform_indices = @transform_4, window_bounds = array<i64: 8, 128>}]} {
    %c0 = arith.constant 0 : index
    %c0_0 = arith.constant 0 : index
    %0 = vector.load %arg1[%c0, %c0_0] : memref<8x256xf32, #tpu.memory_space<vmem>>, vector<8x256xf32>
    %c0_1 = arith.constant 0 : index
    %c0_2 = arith.constant 0 : index
    %1 = vector.load %arg2[%c0_1, %c0_2] : memref<2720x512xbf16, #tpu.memory_space<vmem>>, vector<256x512xbf16>
    %c0_3 = arith.constant 0 : index
    %c0_4 = arith.constant 0 : index
    %2 = vector.load %arg3[%c0_3, %c0_4] : memref<16x512xf32, #tpu.memory_space<vmem>>, vector<1x512xf32>
    %3 = arith.truncf %0 : vector<8x256xf32> to vector<8x256xbf16>
    %cst = arith.constant dense<0.000000e+00> : vector<8x512xf32>
    %4 = tpu.matmul %3, %1, %cst {dimension_numbers = #tpu.dot_dimension_numbers<[1], [0], [0], [1], [0, 0, 1, 1], [], []>} : vector<8x256xbf16>, vector<256x512xbf16>, vector<8x512xf32> -> vector<8x512xf32>
    %5 = vector.broadcast %2 : vector<1x512xf32> to vector<8x512xf32>
    %6 = arith.addf %4, %5 : vector<8x512xf32>
    %cst_5 = arith.constant 2.000000e-01 : f32
    %7 = vector.broadcast %cst_5 : f32 to vector<8x512xf32>
    %8 = arith.mulf %7, %6 : vector<8x512xf32>
    %9 = arith.maximumf %6, %8 : vector<8x512xf32>
    %c256 = arith.constant 256 : index
    %c0_6 = arith.constant 0 : index
    %10 = vector.load %arg2[%c256, %c0_6] : memref<2720x512xbf16, #tpu.memory_space<vmem>>, vector<512x256xbf16>
    %c1 = arith.constant 1 : index
    %c0_7 = arith.constant 0 : index
    %11 = vector.load %arg3[%c1, %c0_7] : memref<16x512xf32, #tpu.memory_space<vmem>>, vector<1x256xf32>
    %12 = arith.truncf %9 : vector<8x512xf32> to vector<8x512xbf16>
    %cst_8 = arith.constant dense<0.000000e+00> : vector<8x256xf32>
    %13 = tpu.matmul %12, %10, %cst_8 {dimension_numbers = #tpu.dot_dimension_numbers<[1], [0], [0], [1], [0, 0, 1, 1], [], []>} : vector<8x512xbf16>, vector<512x256xbf16>, vector<8x256xf32> -> vector<8x256xf32>
    %14 = vector.broadcast %11 : vector<1x256xf32> to vector<8x256xf32>
    %15 = arith.addf %13, %14 : vector<8x256xf32>
    %cst_9 = arith.constant 2.000000e-01 : f32
    %16 = vector.broadcast %cst_9 : f32 to vector<8x256xf32>
    %17 = arith.mulf %16, %15 : vector<8x256xf32>
    %18 = arith.maximumf %15, %17 : vector<8x256xf32>
    %c768 = arith.constant 768 : index
    %c0_10 = arith.constant 0 : index
    %19 = vector.load %arg2[%c768, %c0_10] : memref<2720x512xbf16, #tpu.memory_space<vmem>>, vector<256x128xbf16>
    %c2 = arith.constant 2 : index
    %c0_11 = arith.constant 0 : index
    %20 = vector.load %arg3[%c2, %c0_11] : memref<16x512xf32, #tpu.memory_space<vmem>>, vector<1x128xf32>
    %21 = arith.truncf %18 : vector<8x256xf32> to vector<8x256xbf16>
    %cst_12 = arith.constant dense<0.000000e+00> : vector<8x128xf32>
    %22 = tpu.matmul %21, %19, %cst_12 {dimension_numbers = #tpu.dot_dimension_numbers<[1], [0], [0], [1], [0, 0, 1, 1], [], []>} : vector<8x256xbf16>, vector<256x128xbf16>, vector<8x128xf32> -> vector<8x128xf32>
    %23 = vector.broadcast %20 : vector<1x128xf32> to vector<8x128xf32>
    %24 = arith.addf %22, %23 : vector<8x128xf32>
    %cst_13 = arith.constant 2.000000e-01 : f32
    %25 = vector.broadcast %cst_13 : f32 to vector<8x128xf32>
    %26 = arith.mulf %25, %24 : vector<8x128xf32>
    %27 = arith.maximumf %24, %26 : vector<8x128xf32>
    %c1024 = arith.constant 1024 : index
    %c0_14 = arith.constant 0 : index
    %28 = vector.load %arg2[%c1024, %c0_14] : memref<2720x512xbf16, #tpu.memory_space<vmem>>, vector<128x64xbf16>
    %c3 = arith.constant 3 : index
    %c0_15 = arith.constant 0 : index
    %29 = vector.load %arg3[%c3, %c0_15] : memref<16x512xf32, #tpu.memory_space<vmem>>, vector<1x64xf32>
    %30 = arith.truncf %27 : vector<8x128xf32> to vector<8x128xbf16>
    %cst_16 = arith.constant dense<0.000000e+00> : vector<8x64xf32>
    %31 = tpu.matmul %30, %28, %cst_16 {dimension_numbers = #tpu.dot_dimension_numbers<[1], [0], [0], [1], [0, 0, 1, 1], [], []>} : vector<8x128xbf16>, vector<128x64xbf16>, vector<8x64xf32> -> vector<8x64xf32>
    %32 = vector.broadcast %29 : vector<1x64xf32> to vector<8x64xf32>
    %33 = arith.addf %31, %32 : vector<8x64xf32>
    %cst_17 = arith.constant 2.000000e-01 : f32
    %34 = vector.broadcast %cst_17 : f32 to vector<8x64xf32>
    %35 = arith.mulf %34, %33 : vector<8x64xf32>
    %36 = arith.maximumf %33, %35 : vector<8x64xf32>
    %c1152 = arith.constant 1152 : index
    %c0_18 = arith.constant 0 : index
    %37 = vector.load %arg2[%c1152, %c0_18] : memref<2720x512xbf16, #tpu.memory_space<vmem>>, vector<64x32xbf16>
    %c4 = arith.constant 4 : index
    %c0_19 = arith.constant 0 : index
    %38 = vector.load %arg3[%c4, %c0_19] : memref<16x512xf32, #tpu.memory_space<vmem>>, vector<1x32xf32>
    %39 = arith.truncf %36 : vector<8x64xf32> to vector<8x64xbf16>
    %cst_20 = arith.constant dense<0.000000e+00> : vector<8x32xf32>
    %40 = tpu.matmul %39, %37, %cst_20 {dimension_numbers = #tpu.dot_dimension_numbers<[1], [0], [0], [1], [0, 0, 1, 1], [], []>} : vector<8x64xbf16>, vector<64x32xbf16>, vector<8x32xf32> -> vector<8x32xf32>
    %41 = vector.broadcast %38 : vector<1x32xf32> to vector<8x32xf32>
    %42 = arith.addf %40, %41 : vector<8x32xf32>
    %cst_21 = arith.constant 2.000000e-01 : f32
    %43 = vector.broadcast %cst_21 : f32 to vector<8x32xf32>
    %44 = arith.mulf %43, %42 : vector<8x32xf32>
    %45 = arith.maximumf %42, %44 : vector<8x32xf32>
    %c1216 = arith.constant 1216 : index
    %c0_22 = arith.constant 0 : index
    %46 = vector.load %arg2[%c1216, %c0_22] : memref<2720x512xbf16, #tpu.memory_space<vmem>>, vector<32x16xbf16>
    %c5 = arith.constant 5 : index
    %c0_23 = arith.constant 0 : index
    %47 = vector.load %arg3[%c5, %c0_23] : memref<16x512xf32, #tpu.memory_space<vmem>>, vector<1x16xf32>
    %48 = arith.truncf %45 : vector<8x32xf32> to vector<8x32xbf16>
    %cst_24 = arith.constant dense<0.000000e+00> : vector<8x16xf32>
    %49 = tpu.matmul %48, %46, %cst_24 {dimension_numbers = #tpu.dot_dimension_numbers<[1], [0], [0], [1], [0, 0, 1, 1], [], []>} : vector<8x32xbf16>, vector<32x16xbf16>, vector<8x16xf32> -> vector<8x16xf32>
    %50 = vector.broadcast %47 : vector<1x16xf32> to vector<8x16xf32>
    %51 = arith.addf %49, %50 : vector<8x16xf32>
    %cst_25 = arith.constant 2.000000e-01 : f32
    %52 = vector.broadcast %cst_25 : f32 to vector<8x16xf32>
    %53 = arith.mulf %52, %51 : vector<8x16xf32>
    %54 = arith.maximumf %51, %53 : vector<8x16xf32>
    %c1248 = arith.constant 1248 : index
    %c0_26 = arith.constant 0 : index
    %55 = vector.load %arg2[%c1248, %c0_26] : memref<2720x512xbf16, #tpu.memory_space<vmem>>, vector<16x32xbf16>
    %c6 = arith.constant 6 : index
    %c0_27 = arith.constant 0 : index
    %56 = vector.load %arg3[%c6, %c0_27] : memref<16x512xf32, #tpu.memory_space<vmem>>, vector<1x32xf32>
    %57 = arith.truncf %54 : vector<8x16xf32> to vector<8x16xbf16>
    %cst_28 = arith.constant dense<0.000000e+00> : vector<8x32xf32>
    %58 = tpu.matmul %57, %55, %cst_28 {dimension_numbers = #tpu.dot_dimension_numbers<[1], [0], [0], [1], [0, 0, 1, 1], [], []>} : vector<8x16xbf16>, vector<16x32xbf16>, vector<8x32xf32> -> vector<8x32xf32>
    %59 = vector.broadcast %56 : vector<1x32xf32> to vector<8x32xf32>
    %60 = arith.addf %58, %59 : vector<8x32xf32>
    %cst_29 = arith.constant 2.000000e-01 : f32
    %61 = vector.broadcast %cst_29 : f32 to vector<8x32xf32>
    %62 = arith.mulf %61, %60 : vector<8x32xf32>
    %63 = arith.maximumf %60, %62 : vector<8x32xf32>
    %c1264 = arith.constant 1264 : index
    %c0_30 = arith.constant 0 : index
    %64 = vector.load %arg2[%c1264, %c0_30] : memref<2720x512xbf16, #tpu.memory_space<vmem>>, vector<32x64xbf16>
    %c7 = arith.constant 7 : index
    %c0_31 = arith.constant 0 : index
    %65 = vector.load %arg3[%c7, %c0_31] : memref<16x512xf32, #tpu.memory_space<vmem>>, vector<1x64xf32>
    %66 = arith.truncf %63 : vector<8x32xf32> to vector<8x32xbf16>
    %cst_32 = arith.constant dense<0.000000e+00> : vector<8x64xf32>
    %67 = tpu.matmul %66, %64, %cst_32 {dimension_numbers = #tpu.dot_dimension_numbers<[1], [0], [0], [1], [0, 0, 1, 1], [], []>} : vector<8x32xbf16>, vector<32x64xbf16>, vector<8x64xf32> -> vector<8x64xf32>
    %68 = vector.broadcast %65 : vector<1x64xf32> to vector<8x64xf32>
    %69 = arith.addf %67, %68 : vector<8x64xf32>
    %cst_33 = arith.constant 2.000000e-01 : f32
    %70 = vector.broadcast %cst_33 : f32 to vector<8x64xf32>
    %71 = arith.mulf %70, %69 : vector<8x64xf32>
    %72 = arith.maximumf %69, %71 : vector<8x64xf32>
    %c1296 = arith.constant 1296 : index
    %c0_34 = arith.constant 0 : index
    %73 = vector.load %arg2[%c1296, %c0_34] : memref<2720x512xbf16, #tpu.memory_space<vmem>>, vector<64x128xbf16>
    %c8 = arith.constant 8 : index
    %c0_35 = arith.constant 0 : index
    %74 = vector.load %arg3[%c8, %c0_35] : memref<16x512xf32, #tpu.memory_space<vmem>>, vector<1x128xf32>
    %75 = arith.truncf %72 : vector<8x64xf32> to vector<8x64xbf16>
    %cst_36 = arith.constant dense<0.000000e+00> : vector<8x128xf32>
    %76 = tpu.matmul %75, %73, %cst_36 {dimension_numbers = #tpu.dot_dimension_numbers<[1], [0], [0], [1], [0, 0, 1, 1], [], []>} : vector<8x64xbf16>, vector<64x128xbf16>, vector<8x128xf32> -> vector<8x128xf32>
    %77 = vector.broadcast %74 : vector<1x128xf32> to vector<8x128xf32>
    %78 = arith.addf %76, %77 : vector<8x128xf32>
    %cst_37 = arith.constant 2.000000e-01 : f32
    %79 = vector.broadcast %cst_37 : f32 to vector<8x128xf32>
    %80 = arith.mulf %79, %78 : vector<8x128xf32>
    %81 = arith.maximumf %78, %80 : vector<8x128xf32>
    %c1360 = arith.constant 1360 : index
    %c0_38 = arith.constant 0 : index
    %82 = vector.load %arg2[%c1360, %c0_38] : memref<2720x512xbf16, #tpu.memory_space<vmem>>, vector<128x256xbf16>
    %c9 = arith.constant 9 : index
    %c0_39 = arith.constant 0 : index
    %83 = vector.load %arg3[%c9, %c0_39] : memref<16x512xf32, #tpu.memory_space<vmem>>, vector<1x256xf32>
    %84 = arith.truncf %81 : vector<8x128xf32> to vector<8x128xbf16>
    %cst_40 = arith.constant dense<0.000000e+00> : vector<8x256xf32>
    %85 = tpu.matmul %84, %82, %cst_40 {dimension_numbers = #tpu.dot_dimension_numbers<[1], [0], [0], [1], [0, 0, 1, 1], [], []>} : vector<8x128xbf16>, vector<128x256xbf16>, vector<8x256xf32> -> vector<8x256xf32>
    %86 = vector.broadcast %83 : vector<1x256xf32> to vector<8x256xf32>
    %87 = arith.addf %85, %86 : vector<8x256xf32>
    %cst_41 = arith.constant 2.000000e-01 : f32
    %88 = vector.broadcast %cst_41 : f32 to vector<8x256xf32>
    %89 = arith.mulf %88, %87 : vector<8x256xf32>
    %90 = arith.maximumf %87, %89 : vector<8x256xf32>
    %c1488 = arith.constant 1488 : index
    %c0_42 = arith.constant 0 : index
    %91 = vector.load %arg2[%c1488, %c0_42] : memref<2720x512xbf16, #tpu.memory_space<vmem>>, vector<256x512xbf16>
    %c10 = arith.constant 10 : index
    %c0_43 = arith.constant 0 : index
    %92 = vector.load %arg3[%c10, %c0_43] : memref<16x512xf32, #tpu.memory_space<vmem>>, vector<1x512xf32>
    %93 = arith.truncf %90 : vector<8x256xf32> to vector<8x256xbf16>
    %cst_44 = arith.constant dense<0.000000e+00> : vector<8x512xf32>
    %94 = tpu.matmul %93, %91, %cst_44 {dimension_numbers = #tpu.dot_dimension_numbers<[1], [0], [0], [1], [0, 0, 1, 1], [], []>} : vector<8x256xbf16>, vector<256x512xbf16>, vector<8x512xf32> -> vector<8x512xf32>
    %95 = vector.broadcast %92 : vector<1x512xf32> to vector<8x512xf32>
    %96 = arith.addf %94, %95 : vector<8x512xf32>
    %cst_45 = arith.constant 2.000000e-01 : f32
    %97 = vector.broadcast %cst_45 : f32 to vector<8x512xf32>
    %98 = arith.mulf %97, %96 : vector<8x512xf32>
    %99 = arith.maximumf %96, %98 : vector<8x512xf32>
    %c1744 = arith.constant 1744 : index
    %c0_46 = arith.constant 0 : index
    %100 = vector.load %arg2[%c1744, %c0_46] : memref<2720x512xbf16, #tpu.memory_space<vmem>>, vector<512x256xbf16>
    %c11 = arith.constant 11 : index
    %c0_47 = arith.constant 0 : index
    %101 = vector.load %arg3[%c11, %c0_47] : memref<16x512xf32, #tpu.memory_space<vmem>>, vector<1x256xf32>
    %102 = arith.truncf %99 : vector<8x512xf32> to vector<8x512xbf16>
    %cst_48 = arith.constant dense<0.000000e+00> : vector<8x256xf32>
    %103 = tpu.matmul %102, %100, %cst_48 {dimension_numbers = #tpu.dot_dimension_numbers<[1], [0], [0], [1], [0, 0, 1, 1], [], []>} : vector<8x512xbf16>, vector<512x256xbf16>, vector<8x256xf32> -> vector<8x256xf32>
    %104 = vector.broadcast %101 : vector<1x256xf32> to vector<8x256xf32>
    %105 = arith.addf %103, %104 : vector<8x256xf32>
    %c0_49 = arith.constant 0 : index
    %c0_50 = arith.constant 0 : index
    %106 = vector.load %arg4[%c0_49, %c0_50] : memref<8x256xf32, #tpu.memory_space<vmem>>, vector<8x256xf32>
    tpu.vector_store %arg4[%c0_49, %c0_50], %105 {strides = array<i32>} : memref<8x256xf32, #tpu.memory_space<vmem>>, vector<8x256xf32>,
    %c2256 = arith.constant 2256 : index
    %c0_51 = arith.constant 0 : index
    %107 = vector.load %arg2[%c2256, %c0_51] : memref<2720x512xbf16, #tpu.memory_space<vmem>>, vector<16x256xbf16>
    %c12 = arith.constant 12 : index
    %c0_52 = arith.constant 0 : index
    %108 = vector.load %arg3[%c12, %c0_52] : memref<16x512xf32, #tpu.memory_space<vmem>>, vector<1x256xf32>
    %109 = arith.truncf %54 : vector<8x16xf32> to vector<8x16xbf16>
    %cst_53 = arith.constant dense<0.000000e+00> : vector<8x256xf32>
    %110 = tpu.matmul %109, %107, %cst_53 {dimension_numbers = #tpu.dot_dimension_numbers<[1], [0], [0], [1], [0, 0, 1, 1], [], []>} : vector<8x16xbf16>, vector<16x256xbf16>, vector<8x256xf32> -> vector<8x256xf32>
    %111 = vector.broadcast %108 : vector<1x256xf32> to vector<8x256xf32>
    %112 = arith.addf %110, %111 : vector<8x256xf32>
    %cst_54 = arith.constant 2.000000e-01 : f32
    %113 = vector.broadcast %cst_54 : f32 to vector<8x256xf32>
    %114 = arith.mulf %113, %112 : vector<8x256xf32>
    %115 = arith.maximumf %112, %114 : vector<8x256xf32>
    %c2272 = arith.constant 2272 : index
    %c0_55 = arith.constant 0 : index
    %116 = vector.load %arg2[%c2272, %c0_55] : memref<2720x512xbf16, #tpu.memory_space<vmem>>, vector<256x128xbf16>
    %c13 = arith.constant 13 : index
    %c0_56 = arith.constant 0 : index
    %117 = vector.load %arg3[%c13, %c0_56] : memref<16x512xf32, #tpu.memory_space<vmem>>, vector<1x128xf32>
    %118 = arith.truncf %115 : vector<8x256xf32> to vector<8x256xbf16>
    %cst_57 = arith.constant dense<0.000000e+00> : vector<8x128xf32>
    %119 = tpu.matmul %118, %116, %cst_57 {dimension_numbers = #tpu.dot_dimension_numbers<[1], [0], [0], [1], [0, 0, 1, 1], [], []>} : vector<8x256xbf16>, vector<256x128xbf16>, vector<8x128xf32> -> vector<8x128xf32>
    %120 = vector.broadcast %117 : vector<1x128xf32> to vector<8x128xf32>
    %121 = arith.addf %119, %120 : vector<8x128xf32>
    %cst_58 = arith.constant 2.000000e-01 : f32
    %122 = vector.broadcast %cst_58 : f32 to vector<8x128xf32>
    %123 = arith.mulf %122, %121 : vector<8x128xf32>
    %124 = arith.maximumf %121, %123 : vector<8x128xf32>
    %c2528 = arith.constant 2528 : index
    %c0_59 = arith.constant 0 : index
    %125 = vector.load %arg2[%c2528, %c0_59] : memref<2720x512xbf16, #tpu.memory_space<vmem>>, vector<128x64xbf16>
    %c14 = arith.constant 14 : index
    %c0_60 = arith.constant 0 : index
    %126 = vector.load %arg3[%c14, %c0_60] : memref<16x512xf32, #tpu.memory_space<vmem>>, vector<1x64xf32>
    %127 = arith.truncf %124 : vector<8x128xf32> to vector<8x128xbf16>
    %cst_61 = arith.constant dense<0.000000e+00> : vector<8x64xf32>
    %128 = tpu.matmul %127, %125, %cst_61 {dimension_numbers = #tpu.dot_dimension_numbers<[1], [0], [0], [1], [0, 0, 1, 1], [], []>} : vector<8x128xbf16>, vector<128x64xbf16>, vector<8x64xf32> -> vector<8x64xf32>
    %129 = vector.broadcast %126 : vector<1x64xf32> to vector<8x64xf32>
    %130 = arith.addf %128, %129 : vector<8x64xf32>
    %cst_62 = arith.constant 2.000000e-01 : f32
    %131 = vector.broadcast %cst_62 : f32 to vector<8x64xf32>
    %132 = arith.mulf %131, %130 : vector<8x64xf32>
    %133 = arith.maximumf %130, %132 : vector<8x64xf32>
    %c2656 = arith.constant 2656 : index
    %c0_63 = arith.constant 0 : index
    %134 = vector.load %arg2[%c2656, %c0_63] : memref<2720x512xbf16, #tpu.memory_space<vmem>>, vector<64x128xbf16>
    %c15 = arith.constant 15 : index
    %c0_64 = arith.constant 0 : index
    %135 = vector.load %arg3[%c15, %c0_64] : memref<16x512xf32, #tpu.memory_space<vmem>>, vector<1x128xf32>
    %136 = arith.truncf %133 : vector<8x64xf32> to vector<8x64xbf16>
    %cst_65 = arith.constant dense<0.000000e+00> : vector<8x128xf32>
    %137 = tpu.matmul %136, %134, %cst_65 {dimension_numbers = #tpu.dot_dimension_numbers<[1], [0], [0], [1], [0, 0, 1, 1], [], []>} : vector<8x64xbf16>, vector<64x128xbf16>, vector<8x128xf32> -> vector<8x128xf32>
    %138 = vector.broadcast %135 : vector<1x128xf32> to vector<8x128xf32>
    %139 = arith.addf %137, %138 : vector<8x128xf32>
    %c0_66 = arith.constant 0 : index
    %c0_67 = arith.constant 0 : index
    %140 = vector.load %arg5[%c0_66, %c0_67] : memref<8x128xf32, #tpu.memory_space<vmem>>, vector<8x128xf32>
    tpu.vector_store %arg5[%c0_66, %c0_67], %139 {strides = array<i32>} : memref<8x128xf32, #tpu.memory_space<vmem>>, vector<8x128xf32>,
    return
  }
  func.func @transform_0(%arg0: i32) -> (i32, i32) {
    %c0_i32 = arith.constant 0 : i32
    %c0_i32_0 = arith.constant 0 : i32
    return %arg0, %c0_i32 : i32, i32
  }
  func.func @transform_1(%arg0: i32) -> (i32, i32) {
    %c0_i32 = arith.constant 0 : i32
    %c0_i32_0 = arith.constant 0 : i32
    %c0_i32_1 = arith.constant 0 : i32
    return %c0_i32, %c0_i32_0 : i32, i32
  }
  func.func @transform_2(%arg0: i32) -> (i32, i32) {
    %c0_i32 = arith.constant 0 : i32
    %c0_i32_0 = arith.constant 0 : i32
    %c0_i32_1 = arith.constant 0 : i32
    return %c0_i32, %c0_i32_0 : i32, i32
  }
  func.func @transform_3(%arg0: i32) -> (i32, i32) {
    %c0_i32 = arith.constant 0 : i32
    %c0_i32_0 = arith.constant 0 : i32
    return %arg0, %c0_i32 : i32, i32
  }
  func.func @transform_4(%arg0: i32) -> (i32, i32) {
    %c0_i32 = arith.constant 0 : i32
    %c0_i32_0 = arith.constant 0 : i32
    return %arg0, %c0_i32 : i32, i32
  }
}

</mosaic_0001>

<llo_original>
// kernel: autoencoder_forward.1
$region0: #{autoencoder_forward.1}
  #allocation0 [shape = 'u32[]', space=smem, size = 0x4, offset = 0x4, fixed_abs, tag = 'smem constant byte address 0x4 - core index']
  #allocation1 [shape = 'u32[144,128]{1,0:T(1,128)}', space=vmem, size = 0x12000, scoped, tag = 'internal scratch']
  %s0 = inlined_call_operand.vmem [shape: f32[8,256], index: 0, kind: input, shape index: {}]
  %s1 = inlined_call_operand.vmem [shape: bf16[2720,512], index: 1, kind: input, shape index: {}]
  %s2 = inlined_call_operand.vmem [shape: f32[16,512], index: 2, kind: input, shape index: {}]
  %s3 = inlined_call_operand.vmem [shape: f32[8,256], index: 3, kind: output, shape index: {0}]
  %s4 = inlined_call_operand.vmem [shape: f32[8,128], index: 4, kind: output, shape index: {1}]
  %5 = xla_tuple %s3, %s4
  %s6 = sld [smem:[#allocation0]]
  $region30: #{autoencoder_forward.1} parent=0
    _
  %s8 = ssub.s32 1, %s6
  %s9 = scalar_select 0, %s8, %s6
  // Predicated region
  $region2: #{autoencoder_forward.1} parent=0 // pred_check
    _
  $region3: #{autoencoder_forward.1} parent=0 // pred_check_branch
    %11 = sbr.rel (0) target = $region5
  $region4: #{autoencoder_forward.1} parent=0 // pred_region
    _
  $region5: #{autoencoder_forward.1} parent=0 // pred_fallthru
    _
  // Predicated region
  $region6: #{autoencoder_forward.1} parent=0 // pred_check
    _
  $region7: #{autoencoder_forward.1} parent=0 // pred_check_branch
    %13 = sbr.rel (0) target = $region9
  $region8: #{autoencoder_forward.1} parent=0 // pred_region
    _
  $region9: #{autoencoder_forward.1} parent=0 // pred_fallthru
    _
  // Predicated region
  $region10: #{autoencoder_forward.1} parent=0 // pred_check
    _
  $region11: #{autoencoder_forward.1} parent=0 // pred_check_branch
    %15 = sbr.rel (0) target = $region13
  $region12: #{autoencoder_forward.1} parent=0 // pred_region
    _
  $region13: #{autoencoder_forward.1} parent=0 // pred_fallthru
    _
  %v17 = vld [vmem:[%s0] sm:$0xff]
  %v18 = vld [vmem:[%s0 + $0x8] sm:$0xff]
  %v19 = vld [vmem:[%s1] sm:$0xff]
  %v20 = vld [vmem:[%s1 + $0x8] sm:$0xff]
  %v21 = vld [vmem:[%s1 + $0x10] sm:$0xff]
  %v22 = vld [vmem:[%s1 + $0x18] sm:$0xff]
  %v23 = vld [vmem:[%s1 + $0x20] sm:$0xff]
  %v24 = vld [vmem:[%s1 + $0x28] sm:$0xff]
  %v25 = vld [vmem:[%s1 + $0x30] sm:$0xff]
  %v26 = vld [vmem:[%s1 + $0x38] sm:$0xff]
  %v27 = vld [vmem:[%s1 + $0x40] sm:$0xff]
  %v28 = vld [vmem:[%s1 + $0x48] sm:$0xff]
  %v29 = vld [vmem:[%s1 + $0x50] sm:$0xff]
  %v30 = vld [vmem:[%s1 + $0x58] sm:$0xff]
  %v31 = vld [vmem:[%s1 + $0x60] sm:$0xff]
  %v32 = vld [vmem:[%s1 + $0x68] sm:$0xff]
  %v33 = vld [vmem:[%s1 + $0x70] sm:$0xff]
  %v34 = vld [vmem:[%s1 + $0x78] sm:$0xff]
  %v35 = vld [vmem:[%s1 + $0x80] sm:$0xff]
  %v36 = vld [vmem:[%s1 + $0x88] sm:$0xff]
  %v37 = vld [vmem:[%s1 + $0x90] sm:$0xff]
  %v38 = vld [vmem:[%s1 + $0x98] sm:$0xff]
  %v39 = vld [vmem:[%s1 + $0xa0] sm:$0xff]
  %v40 = vld [vmem:[%s1 + $0xa8] sm:$0xff]
  %v41 = vld [vmem:[%s1 + $0xb0] sm:$0xff]
  %v42 = vld [vmem:[%s1 + $0xb8] sm:$0xff]
  %v43 = vld [vmem:[%s1 + $0xc0] sm:$0xff]
  %v44 = vld [vmem:[%s1 + $0xc8] sm:$0xff]
  %v45 = vld [vmem:[%s1 + $0xd0] sm:$0xff]
  %v46 = vld [vmem:[%s1 + $0xd8] sm:$0xff]
  %v47 = vld [vmem:[%s1 + $0xe0] sm:$0xff]
  %v48 = vld [vmem:[%s1 + $0xe8] sm:$0xff]
  %v49 = vld [vmem:[%s1 + $0xf0] sm:$0xff]
  %v50 = vld [vmem:[%s1 + $0xf8] sm:$0xff]
  %v51 = vld [vmem:[%s1 + $0x100] sm:$0xff]
  %v52 = vld [vmem:[%s1 + $0x108] sm:$0xff]
  %v53 = vld [vmem:[%s1 + $0x110] sm:$0xff]
  %v54 = vld [vmem:[%s1 + $0x118] sm:$0xff]
  %v55 = vld [vmem:[%s1 + $0x120] sm:$0xff]
  %v56 = vld [vmem:[%s1 + $0x128] sm:$0xff]
  %v57 = vld [vmem:[%s1 + $0x130] sm:$0xff]
  %v58 = vld [vmem:[%s1 + $0x138] sm:$0xff]
  %v59 = vld [vmem:[%s1 + $0x140] sm:$0xff]
  %v60 = vld [vmem:[%s1 + $0x148] sm:$0xff]
  %v61 = vld [vmem:[%s1 + $0x150] sm:$0xff]
  %v62 = vld [vmem:[%s1 + $0x158] sm:$0xff]
  %v63 = vld [vmem:[%s1 + $0x160] sm:$0xff]
  %v64 = vld [vmem:[%s1 + $0x168] sm:$0xff]
  %v65 = vld [vmem:[%s1 + $0x170] sm:$0xff]
  %v66 = vld [vmem:[%s1 + $0x178] sm:$0xff]
  %v67 = vld [vmem:[%s1 + $0x180] sm:$0xff]
  %v68 = vld [vmem:[%s1 + $0x188] sm:$0xff]
  %v69 = vld [vmem:[%s1 + $0x190] sm:$0xff]
  %v70 = vld [vmem:[%s1 + $0x198] sm:$0xff]
  %v71 = vld [vmem:[%s1 + $0x1a0] sm:$0xff]
  %v72 = vld [vmem:[%s1 + $0x1a8] sm:$0xff]
  %v73 = vld [vmem:[%s1 + $0x1b0] sm:$0xff]
  %v74 = vld [vmem:[%s1 + $0x1b8] sm:$0xff]
  %v75 = vld [vmem:[%s1 + $0x1c0] sm:$0xff]
  %v76 = vld [vmem:[%s1 + $0x1c8] sm:$0xff]
  %v77 = vld [vmem:[%s1 + $0x1d0] sm:$0xff]
  %v78 = vld [vmem:[%s1 + $0x1d8] sm:$0xff]
  %v79 = vld [vmem:[%s1 + $0x1e0] sm:$0xff]
  %v80 = vld [vmem:[%s1 + $0x1e8] sm:$0xff]
  %v81 = vld [vmem:[%s1 + $0x1f0] sm:$0xff]
  %v82 = vld [vmem:[%s1 + $0x1f8] sm:$0xff]
  %v83 = vld [vmem:[%s2] ss:$8 sm:$0xf]
  %v84 = vpack.c.bf16 %v17, %v17
  %v85 = vpack.c.bf16 %v18, %v18
  %v87 = vlaneseq
  %v88 = vshrl.u32 %v87, 7
  %v89 = vsub.s32 0, %v88
  %v90 = vrot.slane %v83, %v89
  %v91 = vlaneseq
  %v92 = vshrl.u32 %v91, 7
  %v93 = vsub.s32 1, %v92
  %v94 = vrot.slane %v83, %v93
  %v95 = vlaneseq
  %v96 = vshrl.u32 %v95, 7
  %v97 = vsub.s32 2, %v96
  %v98 = vrot.slane %v83, %v97
  %v99 = vlaneseq
  %v100 = vshrl.u32 %v99, 7
  %v101 = vsub.s32 3, %v100
  %v102 = vrot.slane %v83, %v101
  %v171 = vunpack.c.l.b16 %v19
  %v172 = vunpack.c.h.b16 %v19
  %v173 = vunpack.c.l.b16 %v20
  %v174 = vunpack.c.h.b16 %v20
  %v175 = vunpack.c.l.b16 %v21
  %v176 = vunpack.c.h.b16 %v21
  %v177 = vunpack.c.l.b16 %v22
  %v178 = vunpack.c.h.b16 %v22
  %v179 = vunpack.c.l.b16 %v23
  %v180 = vunpack.c.h.b16 %v23
  %v181 = vunpack.c.l.b16 %v24
  %v182 = vunpack.c.h.b16 %v24
  %v183 = vunpack.c.l.b16 %v25
  %v184 = vunpack.c.h.b16 %v25
  %v185 = vunpack.c.l.b16 %v26
  %v186 = vunpack.c.h.b16 %v26
  %v187 = vunpack.c.l.b16 %v27
  %v188 = vunpack.c.h.b16 %v27
  %v189 = vunpack.c.l.b16 %v28
  %v190 = vunpack.c.h.b16 %v28
  %v191 = vunpack.c.l.b16 %v29
  %v192 = vunpack.c.h.b16 %v29
  %v193 = vunpack.c.l.b16 %v30
  %v194 = vunpack.c.h.b16 %v30
  %v195 = vunpack.c.l.b16 %v31
  %v196 = vunpack.c.h.b16 %v31
  %v197 = vunpack.c.l.b16 %v32
  %v198 = vunpack.c.h.b16 %v32
  %v199 = vunpack.c.l.b16 %v33
  %v200 = vunpack.c.h.b16 %v33
  %v201 = vunpack.c.l.b16 %v34
  %v202 = vunpack.c.h.b16 %v34
  %v203 = vunpack.c.l.b16 %v35
  %v204 = vunpack.c.h.b16 %v35
  %v205 = vunpack.c.l.b16 %v36
  %v206 = vunpack.c.h.b16 %v36
  %v207 = vunpack.c.l.b16 %v37
  %v208 = vunpack.c.h.b16 %v37
  %v209 = vunpack.c.l.b16 %v38
  %v210 = vunpack.c.h.b16 %v38
  %v211 = vunpack.c.l.b16 %v39
  %v212 = vunpack.c.h.b16 %v39
  %v213 = vunpack.c.l.b16 %v40
  %v214 = vunpack.c.h.b16 %v40
  %v215 = vunpack.c.l.b16 %v41
  %v216 = vunpack.c.h.b16 %v41
  %v217 = vunpack.c.l.b16 %v42
  %v218 = vunpack.c.h.b16 %v42
  %v219 = vunpack.c.l.b16 %v43
  %v220 = vunpack.c.h.b16 %v43
  %v221 = vunpack.c.l.b16 %v44
  %v222 = vunpack.c.h.b16 %v44
  %v223 = vunpack.c.l.b16 %v45
  %v224 = vunpack.c.h.b16 %v45
  %v225 = vunpack.c.l.b16 %v46
  %v226 = vunpack.c.h.b16 %v46
  %v227 = vunpack.c.l.b16 %v47
  %v228 = vunpack.c.h.b16 %v47
  %v229 = vunpack.c.l.b16 %v48
  %v230 = vunpack.c.h.b16 %v48
  %v231 = vunpack.c.l.b16 %v49
  %v232 = vunpack.c.h.b16 %v49
  %v233 = vunpack.c.l.b16 %v50
  %v234 = vunpack.c.h.b16 %v50
  %v235 = vunpack.c.l.b16 %v51
  %v236 = vunpack.c.h.b16 %v51
  %v237 = vunpack.c.l.b16 %v52
  %v238 = vunpack.c.h.b16 %v52
  %v239 = vunpack.c.l.b16 %v53
  %v240 = vunpack.c.h.b16 %v53
  %v241 = vunpack.c.l.b16 %v54
  %v242 = vunpack.c.h.b16 %v54
  %v243 = vunpack.c.l.b16 %v55
  %v244 = vunpack.c.h.b16 %v55
  %v245 = vunpack.c.l.b16 %v56
  %v246 = vunpack.c.h.b16 %v56
  %v247 = vunpack.c.l.b16 %v57
  %v248 = vunpack.c.h.b16 %v57
  %v249 = vunpack.c.l.b16 %v58
  %v250 = vunpack.c.h.b16 %v58
  %v251 = vunpack.c.l.b16 %v59
  %v252 = vunpack.c.h.b16 %v59
  %v253 = vunpack.c.l.b16 %v60
  %v254 = vunpack.c.h.b16 %v60
  %v255 = vunpack.c.l.b16 %v61
  %v256 = vunpack.c.h.b16 %v61
  %v257 = vunpack.c.l.b16 %v62
  %v258 = vunpack.c.h.b16 %v62
  %v259 = vunpack.c.l.b16 %v63
  %v260 = vunpack.c.h.b16 %v63
  %v261 = vunpack.c.l.b16 %v64
  %v262 = vunpack.c.h.b16 %v64
  %v263 = vunpack.c.l.b16 %v65
  %v264 = vunpack.c.h.b16 %v65
  %v265 = vunpack.c.l.b16 %v66
  %v266 = vunpack.c.h.b16 %v66
  %v267 = vunpack.c.l.b16 %v67
  %v268 = vunpack.c.h.b16 %v67
  %v269 = vunpack.c.l.b16 %v68
  %v270 = vunpack.c.h.b16 %v68
  %v271 = vunpack.c.l.b16 %v69
  %v272 = vunpack.c.h.b16 %v69
  %v273 = vunpack.c.l.b16 %v70
  %v274 = vunpack.c.h.b16 %v70
  %v275 = vunpack.c.l.b16 %v71
  %v276 = vunpack.c.h.b16 %v71
  %v277 = vunpack.c.l.b16 %v72
  %v278 = vunpack.c.h.b16 %v72
  %v279 = vunpack.c.l.b16 %v73
  %v280 = vunpack.c.h.b16 %v73
  %v281 = vunpack.c.l.b16 %v74
  %v282 = vunpack.c.h.b16 %v74
  %v283 = vunpack.c.l.b16 %v75
  %v284 = vunpack.c.h.b16 %v75
  %v285 = vunpack.c.l.b16 %v76
  %v286 = vunpack.c.h.b16 %v76
  %v287 = vunpack.c.l.b16 %v77
  %v288 = vunpack.c.h.b16 %v77
  %v289 = vunpack.c.l.b16 %v78
  %v290 = vunpack.c.h.b16 %v78
  %v291 = vunpack.c.l.b16 %v79
  %v292 = vunpack.c.h.b16 %v79
  %v293 = vunpack.c.l.b16 %v80
  %v294 = vunpack.c.h.b16 %v80
  %v295 = vunpack.c.l.b16 %v81
  %v296 = vunpack.c.h.b16 %v81
  %v297 = vunpack.c.l.b16 %v82
  %v298 = vunpack.c.h.b16 %v82
  %v299 = vpack.c.b16 %v175, %v171
  %v300 = vpack.c.b16 %v176, %v172
  %v301 = vpack.c.b16 %v177, %v173
  %v302 = vpack.c.b16 %v178, %v174
  %v303 = vpack.c.b16 %v183, %v179
  %v304 = vpack.c.b16 %v184, %v180
  %v305 = vpack.c.b16 %v185, %v181
  %v306 = vpack.c.b16 %v186, %v182
  %v307 = vpack.c.b16 %v191, %v187
  %v308 = vpack.c.b16 %v192, %v188
  %v309 = vpack.c.b16 %v193, %v189
  %v310 = vpack.c.b16 %v194, %v190
  %v311 = vpack.c.b16 %v199, %v195
  %v312 = vpack.c.b16 %v200, %v196
  %v313 = vpack.c.b16 %v201, %v197
  %v314 = vpack.c.b16 %v202, %v198
  %v315 = vpack.c.b16 %v207, %v203
  %v316 = vpack.c.b16 %v208, %v204
  %v317 = vpack.c.b16 %v209, %v205
  %v318 = vpack.c.b16 %v210, %v206
  %v319 = vpack.c.b16 %v215, %v211
  %v320 = vpack.c.b16 %v216, %v212
  %v321 = vpack.c.b16 %v217, %v213
  %v322 = vpack.c.b16 %v218, %v214
  %v323 = vpack.c.b16 %v223, %v219
  %v324 = vpack.c.b16 %v224, %v220
  %v325 = vpack.c.b16 %v225, %v221
  %v326 = vpack.c.b16 %v226, %v222
  %v327 = vpack.c.b16 %v231, %v227
  %v328 = vpack.c.b16 %v232, %v228
  %v329 = vpack.c.b16 %v233, %v229
  %v330 = vpack.c.b16 %v234, %v230
  %v331 = vpack.c.b16 %v239, %v235
  %v332 = vpack.c.b16 %v240, %v236
  %v333 = vpack.c.b16 %v241, %v237
  %v334 = vpack.c.b16 %v242, %v238
  %v335 = vpack.c.b16 %v247, %v243
  %v336 = vpack.c.b16 %v248, %v244
  %v337 = vpack.c.b16 %v249, %v245
  %v338 = vpack.c.b16 %v250, %v246
  %v339 = vpack.c.b16 %v255, %v251
  %v340 = vpack.c.b16 %v256, %v252
  %v341 = vpack.c.b16 %v257, %v253
  %v342 = vpack.c.b16 %v258, %v254
  %v343 = vpack.c.b16 %v263, %v259
  %v344 = vpack.c.b16 %v264, %v260
  %v345 = vpack.c.b16 %v265, %v261
  %v346 = vpack.c.b16 %v266, %v262
  %v347 = vpack.c.b16 %v271, %v267
  %v348 = vpack.c.b16 %v272, %v268
  %v349 = vpack.c.b16 %v273, %v269
  %v350 = vpack.c.b16 %v274, %v270
  %v351 = vpack.c.b16 %v279, %v275
  %v352 = vpack.c.b16 %v280, %v276
  %v353 = vpack.c.b16 %v281, %v277
  %v354 = vpack.c.b16 %v282, %v278
  %v355 = vpack.c.b16 %v287, %v283
  %v356 = vpack.c.b16 %v288, %v284
  %v357 = vpack.c.b16 %v289, %v285
  %v358 = vpack.c.b16 %v290, %v286
  %v359 = vpack.c.b16 %v295, %v291
  %v360 = vpack.c.b16 %v296, %v292
  %v361 = vpack.c.b16 %v297, %v293
  %v362 = vpack.c.b16 %v298, %v294
  %427 = vmatprep.subr.bf16.mxu0 %v300
  %428 = vmatpush1.bf16.msra.mxu0 %v299
  %429 = vmatprep.subr.bf16.mxu0 %v304
  %430 = vmatpush1.bf16.msra.mxu0 %v303
  %431 = vmatprep.subr.bf16.mxu0 %v308
  %432 = vmatpush1.bf16.msra.mxu0 %v307
  %433 = vmatprep.subr.bf16.mxu0 %v312
  %434 = vmatpush1.bf16.msra.mxu0 %v311
  %435 = vmatprep.subr.bf16.mxu0 %v316
  %436 = vmatpush1.bf16.msra.mxu0 %v315
  %437 = vmatprep.subr.bf16.mxu0 %v320
  %438 = vmatpush1.bf16.msra.mxu0 %v319
  %439 = vmatprep.subr.bf16.mxu0 %v324
  %440 = vmatpush1.bf16.msra.mxu0 %v323
  %441 = vmatprep.subr.bf16.mxu0 %v328
  %442 = vmatpush1.bf16.msra.mxu0 %v327
  %443 = vmatprep.subr.bf16.mxu0 %v332
  %444 = vmatpush1.bf16.msra.mxu0 %v331
  %445 = vmatprep.subr.bf16.mxu0 %v336
  %446 = vmatpush1.bf16.msra.mxu0 %v335
  %447 = vmatprep.subr.bf16.mxu0 %v340
  %448 = vmatpush1.bf16.msra.mxu0 %v339
  %449 = vmatprep.subr.bf16.mxu0 %v344
  %450 = vmatpush1.bf16.msra.mxu0 %v343
  %451 = vmatprep.subr.bf16.mxu0 %v348
  %452 = vmatpush1.bf16.msra.mxu0 %v347
  %453 = vmatprep.subr.bf16.mxu0 %v352
  %454 = vmatpush1.bf16.msra.mxu0 %v351
  %455 = vmatprep.subr.bf16.mxu0 %v356
  %456 = vmatpush1.bf16.msra.mxu0 %v355
  %457 = vmatprep.subr.bf16.mxu0 %v360
  %458 = vmatpush1.bf16.msra.mxu0 %v359
  %459 = vmatprep.mubr.bf16.mxu0 %v85
  %460 = vmatmul.mubr.bf16.gmra.mrb[0].mxu0 %v84
  %v461 = vpop.f32.mrb[0].mxu0
  %v462 = vadd.f32 %v90, %v461
  %v463 = vpop.f32.mrb[0].mxu0
  %v464 = vadd.f32 %v94, %v463
  %v465 = vpop.f32.mrb[0].mxu0
  %v466 = vpop.f32.mrb[0].mxu0
  %467 = vdwg.mxu0
  %468 = vmatprep.subr.bf16.mxu0 %v302
  %469 = vmatpush1.bf16.msra.mxu0 %v301
  %470 = vmatprep.subr.bf16.mxu0 %v306
  %471 = vmatpush1.bf16.msra.mxu0 %v305
  %472 = vmatprep.subr.bf16.mxu0 %v310
  %473 = vmatpush1.bf16.msra.mxu0 %v309
  %474 = vmatprep.subr.bf16.mxu0 %v314
  %475 = vmatpush1.bf16.msra.mxu0 %v313
  %476 = vmatprep.subr.bf16.mxu0 %v318
  %477 = vmatpush1.bf16.msra.mxu0 %v317
  %478 = vmatprep.subr.bf16.mxu0 %v322
  %479 = vmatpush1.bf16.msra.mxu0 %v321
  %480 = vmatprep.subr.bf16.mxu0 %v326
  %481 = vmatpush1.bf16.msra.mxu0 %v325
  %482 = vmatprep.subr.bf16.mxu0 %v330
  %483 = vmatpush1.bf16.msra.mxu0 %v329
  %484 = vmatprep.subr.bf16.mxu0 %v334
  %485 = vmatpush1.bf16.msra.mxu0 %v333
  %486 = vmatprep.subr.bf16.mxu0 %v338
  %487 = vmatpush1.bf16.msra.mxu0 %v337
  %488 = vmatprep.subr.bf16.mxu0 %v342
  %489 = vmatpush1.bf16.msra.mxu0 %v341
  %490 = vmatprep.subr.bf16.mxu0 %v346
  %491 = vmatpush1.bf16.msra.mxu0 %v345
  %492 = vmatprep.subr.bf16.mxu0 %v350
  %493 = vmatpush1.bf16.msra.mxu0 %v349
  %494 = vmatprep.subr.bf16.mxu0 %v354
  %495 = vmatpush1.bf16.msra.mxu0 %v353
  %496 = vmatprep.subr.bf16.mxu0 %v358
  %497 = vmatpush1.bf16.msra.mxu0 %v357
  %498 = vmatprep.subr.bf16.mxu0 %v362
  %499 = vmatpush1.bf16.msra.mxu0 %v361
  %500 = vmatprep.mubr.bf16.mxu0 %v85
  %501 = vmatmul.mubr.bf16.gmra.mrb[0].mxu0 %v84
  %v502 = vpop.f32.mrb[0].mxu0
  %v503 = vadd.f32 %v98, %v502
  %v504 = vpop.f32.mrb[0].mxu0
  %v505 = vadd.f32 %v102, %v504
  %v506 = vpop.f32.mrb[0].mxu0
  %v507 = vpop.f32.mrb[0].mxu0
  %508 = vdwg.mxu0
  %v509 = vmul.f32 %v462, 0.2
  %v510 = vmul.f32 %v464, 0.2
  %v511 = vmul.f32 %v503, 0.2
  %v512 = vmul.f32 %v505, 0.2
  %v513 = vmax.f32 %v462, %v509
  %v514 = vmax.f32 %v464, %v510
  %v515 = vmax.f32 %v503, %v511
  %v516 = vmax.f32 %v505, %v512
  %v517 = vld [vmem:[%s1 + $0x200] sm:$0xff]
  %v518 = vld [vmem:[%s1 + $0x210] sm:$0xff]
  %v519 = vld [vmem:[%s1 + $0x220] sm:$0xff]
  %v520 = vld [vmem:[%s1 + $0x230] sm:$0xff]
  %v521 = vld [vmem:[%s1 + $0x240] sm:$0xff]
  %v522 = vld [vmem:[%s1 + $0x250] sm:$0xff]
  %v523 = vld [vmem:[%s1 + $0x260] sm:$0xff]
  %v524 = vld [vmem:[%s1 + $0x270] sm:$0xff]
  %v525 = vld [vmem:[%s1 + $0x280] sm:$0xff]
  %v526 = vld [vmem:[%s1 + $0x290] sm:$0xff]
  %v527 = vld [vmem:[%s1 + $0x2a0] sm:$0xff]
  %v528 = vld [vmem:[%s1 + $0x2b0] sm:$0xff]
  %v529 = vld [vmem:[%s1 + $0x2c0] sm:$0xff]
  %v530 = vld [vmem:[%s1 + $0x2d0] sm:$0xff]
  %v531 = vld [vmem:[%s1 + $0x2e0] sm:$0xff]
  %v532 = vld [vmem:[%s1 + $0x2f0] sm:$0xff]
  %v533 = vld [vmem:[%s1 + $0x300] sm:$0xff]
  %v534 = vld [vmem:[%s1 + $0x310] sm:$0xff]
  %v535 = vld [vmem:[%s1 + $0x320] sm:$0xff]
  %v536 = vld [vmem:[%s1 + $0x330] sm:$0xff]
  %v537 = vld [vmem:[%s1 + $0x340] sm:$0xff]
  %v538 = vld [vmem:[%s1 + $0x350] sm:$0xff]
  %v539 = vld [vmem:[%s1 + $0x360] sm:$0xff]
  %v540 = vld [vmem:[%s1 + $0x370] sm:$0xff]
  %v541 = vld [vmem:[%s1 + $0x380] sm:$0xff]
  %v542 = vld [vmem:[%s1 + $0x390] sm:$0xff]
  %v543 = vld [vmem:[%s1 + $0x3a0] sm:$0xff]
  %v544 = vld [vmem:[%s1 + $0x3b0] sm:$0xff]
  %v545 = vld [vmem:[%s1 + $0x3c0] sm:$0xff]
  %v546 = vld [vmem:[%s1 + $0x3d0] sm:$0xff]
  %v547 = vld [vmem:[%s1 + $0x3e0] sm:$0xff]
  %v548 = vld [vmem:[%s1 + $0x3f0] sm:$0xff]
  %v549 = vld [vmem:[%s1 + $0x400] sm:$0xff]
  %v550 = vld [vmem:[%s1 + $0x410] sm:$0xff]
  %v551 = vld [vmem:[%s1 + $0x420] sm:$0xff]
  %v552 = vld [vmem:[%s1 + $0x430] sm:$0xff]
  %v553 = vld [vmem:[%s1 + $0x440] sm:$0xff]
  %v554 = vld [vmem:[%s1 + $0x450] sm:$0xff]
  %v555 = vld [vmem:[%s1 + $0x460] sm:$0xff]
  %v556 = vld [vmem:[%s1 + $0x470] sm:$0xff]
  %v557 = vld [vmem:[%s1 + $0x480] sm:$0xff]
  %v558 = vld [vmem:[%s1 + $0x490] sm:$0xff]
  %v559 = vld [vmem:[%s1 + $0x4a0] sm:$0xff]
  %v560 = vld [vmem:[%s1 + $0x4b0] sm:$0xff]
  %v561 = vld [vmem:[%s1 + $0x4c0] sm:$0xff]
  %v562 = vld [vmem:[%s1 + $0x4d0] sm:$0xff]
  %v563 = vld [vmem:[%s1 + $0x4e0] sm:$0xff]
  %v564 = vld [vmem:[%s1 + $0x4f0] sm:$0xff]
  %v565 = vld [vmem:[%s1 + $0x500] sm:$0xff]
  %v566 = vld [vmem:[%s1 + $0x510] sm:$0xff]
  %v567 = vld [vmem:[%s1 + $0x520] sm:$0xff]
  %v568 = vld [vmem:[%s1 + $0x530] sm:$0xff]
  %v569 = vld [vmem:[%s1 + $0x540] sm:$0xff]
  %v570 = vld [vmem:[%s1 + $0x550] sm:$0xff]
  %v571 = vld [vmem:[%s1 + $0x560] sm:$0xff]
  %v572 = vld [vmem:[%s1 + $0x570] sm:$0xff]
  %v573 = vld [vmem:[%s1 + $0x580] sm:$0xff]
  %v574 = vld [vmem:[%s1 + $0x590] sm:$0xff]
  %v575 = vld [vmem:[%s1 + $0x5a0] sm:$0xff]
  %v576 = vld [vmem:[%s1 + $0x5b0] sm:$0xff]
  %v577 = vld [vmem:[%s1 + $0x5c0] sm:$0xff]
  %v578 = vld [vmem:[%s1 + $0x5d0] sm:$0xff]
  %v579 = vld [vmem:[%s1 + $0x5e0] sm:$0xff]
  %v580 = vld [vmem:[%s1 + $0x5f0] sm:$0xff]
  %s581 = scalar_lea.vmem %s2, 1
  %v582 = vld [vmem:[%s581] ss:$8 sm:$0x3]
  %v583 = vpack.c.bf16 %v513, %v513
  %v584 = vpack.c.bf16 %v514, %v514
  %v585 = vpack.c.bf16 %v515, %v515
  %v586 = vpack.c.bf16 %v516, %v516
  %v588 = vlaneseq
  %v589 = vshrl.u32 %v588, 7
  %v590 = vsub.s32 0, %v589
  %v591 = vrot.slane %v582, %v590
  %v592 = vlaneseq
  %v593 = vshrl.u32 %v592, 7
  %v594 = vsub.s32 1, %v593
  %v595 = vrot.slane %v582, %v594
  %v662 = vunpack.c.l.b16 %v517
  %v663 = vunpack.c.h.b16 %v517
  %v664 = vunpack.c.l.b16 %v518
  %v665 = vunpack.c.h.b16 %v518
  %v666 = vunpack.c.l.b16 %v519
  %v667 = vunpack.c.h.b16 %v519
  %v668 = vunpack.c.l.b16 %v520
  %v669 = vunpack.c.h.b16 %v520
  %v670 = vunpack.c.l.b16 %v521
  %v671 = vunpack.c.h.b16 %v521
  %v672 = vunpack.c.l.b16 %v522
  %v673 = vunpack.c.h.b16 %v522
  %v674 = vunpack.c.l.b16 %v523
  %v675 = vunpack.c.h.b16 %v523
  %v676 = vunpack.c.l.b16 %v524
  %v677 = vunpack.c.h.b16 %v524
  %v678 = vunpack.c.l.b16 %v525
  %v679 = vunpack.c.h.b16 %v525
  %v680 = vunpack.c.l.b16 %v526
  %v681 = vunpack.c.h.b16 %v526
  %v682 = vunpack.c.l.b16 %v527
  %v683 = vunpack.c.h.b16 %v527
  %v684 = vunpack.c.l.b16 %v528
  %v685 = vunpack.c.h.b16 %v528
  %v686 = vunpack.c.l.b16 %v529
  %v687 = vunpack.c.h.b16 %v529
  %v688 = vunpack.c.l.b16 %v530
  %v689 = vunpack.c.h.b16 %v530
  %v690 = vunpack.c.l.b16 %v531
  %v691 = vunpack.c.h.b16 %v531
  %v692 = vunpack.c.l.b16 %v532
  %v693 = vunpack.c.h.b16 %v532
  %v694 = vunpack.c.l.b16 %v533
  %v695 = vunpack.c.h.b16 %v533
  %v696 = vunpack.c.l.b16 %v534
  %v697 = vunpack.c.h.b16 %v534
  %v698 = vunpack.c.l.b16 %v535
  %v699 = vunpack.c.h.b16 %v535
  %v700 = vunpack.c.l.b16 %v536
  %v701 = vunpack.c.h.b16 %v536
  %v702 = vunpack.c.l.b16 %v537
  %v703 = vunpack.c.h.b16 %v537
  %v704 = vunpack.c.l.b16 %v538
  %v705 = vunpack.c.h.b16 %v538
  %v706 = vunpack.c.l.b16 %v539
  %v707 = vunpack.c.h.b16 %v539
  %v708 = vunpack.c.l.b16 %v540
  %v709 = vunpack.c.h.b16 %v540
  %v710 = vunpack.c.l.b16 %v541
  %v711 = vunpack.c.h.b16 %v541
  %v712 = vunpack.c.l.b16 %v542
  %v713 = vunpack.c.h.b16 %v542
  %v714 = vunpack.c.l.b16 %v543
  %v715 = vunpack.c.h.b16 %v543
  %v716 = vunpack.c.l.b16 %v544
  %v717 = vunpack.c.h.b16 %v544
  %v718 = vunpack.c.l.b16 %v545
  %v719 = vunpack.c.h.b16 %v545
  %v720 = vunpack.c.l.b16 %v546
  %v721 = vunpack.c.h.b16 %v546
  %v722 = vunpack.c.l.b16 %v547
  %v723 = vunpack.c.h.b16 %v547
  %v724 = vunpack.c.l.b16 %v548
  %v725 = vunpack.c.h.b16 %v548
  %v726 = vunpack.c.l.b16 %v549
  %v727 = vunpack.c.h.b16 %v549
  %v728 = vunpack.c.l.b16 %v550
  %v729 = vunpack.c.h.b16 %v550
  %v730 = vunpack.c.l.b16 %v551
  %v731 = vunpack.c.h.b16 %v551
  %v732 = vunpack.c.l.b16 %v552
  %v733 = vunpack.c.h.b16 %v552
  %v734 = vunpack.c.l.b16 %v553
  %v735 = vunpack.c.h.b16 %v553
  %v736 = vunpack.c.l.b16 %v554
  %v737 = vunpack.c.h.b16 %v554
  %v738 = vunpack.c.l.b16 %v555
  %v739 = vunpack.c.h.b16 %v555
  %v740 = vunpack.c.l.b16 %v556
  %v741 = vunpack.c.h.b16 %v556
  %v742 = vunpack.c.l.b16 %v557
  %v743 = vunpack.c.h.b16 %v557
  %v744 = vunpack.c.l.b16 %v558
  %v745 = vunpack.c.h.b16 %v558
  %v746 = vunpack.c.l.b16 %v559
  %v747 = vunpack.c.h.b16 %v559
  %v748 = vunpack.c.l.b16 %v560
  %v749 = vunpack.c.h.b16 %v560
  %v750 = vunpack.c.l.b16 %v561
  %v751 = vunpack.c.h.b16 %v561
  %v752 = vunpack.c.l.b16 %v562
  %v753 = vunpack.c.h.b16 %v562
  %v754 = vunpack.c.l.b16 %v563
  %v755 = vunpack.c.h.b16 %v563
  %v756 = vunpack.c.l.b16 %v564
  %v757 = vunpack.c.h.b16 %v564
  %v758 = vunpack.c.l.b16 %v565
  %v759 = vunpack.c.h.b16 %v565
  %v760 = vunpack.c.l.b16 %v566
  %v761 = vunpack.c.h.b16 %v566
  %v762 = vunpack.c.l.b16 %v567
  %v763 = vunpack.c.h.b16 %v567
  %v764 = vunpack.c.l.b16 %v568
  %v765 = vunpack.c.h.b16 %v568
  %v766 = vunpack.c.l.b16 %v569
  %v767 = vunpack.c.h.b16 %v569
  %v768 = vunpack.c.l.b16 %v570
  %v769 = vunpack.c.h.b16 %v570
  %v770 = vunpack.c.l.b16 %v571
  %v771 = vunpack.c.h.b16 %v571
  %v772 = vunpack.c.l.b16 %v572
  %v773 = vunpack.c.h.b16 %v572
  %v774 = vunpack.c.l.b16 %v573
  %v775 = vunpack.c.h.b16 %v573
  %v776 = vunpack.c.l.b16 %v574
  %v777 = vunpack.c.h.b16 %v574
  %v778 = vunpack.c.l.b16 %v575
  %v779 = vunpack.c.h.b16 %v575
  %v780 = vunpack.c.l.b16 %v576
  %v781 = vunpack.c.h.b16 %v576
  %v782 = vunpack.c.l.b16 %v577
  %v783 = vunpack.c.h.b16 %v577
  %v784 = vunpack.c.l.b16 %v578
  %v785 = vunpack.c.h.b16 %v578
  %v786 = vunpack.c.l.b16 %v579
  %v787 = vunpack.c.h.b16 %v579
  %v788 = vunpack.c.l.b16 %v580
  %v789 = vunpack.c.h.b16 %v580
  %v790 = vpack.c.b16 %v664, %v662
  %v791 = vpack.c.b16 %v665, %v663
  %v792 = vpack.c.b16 %v668, %v666
  %v793 = vpack.c.b16 %v669, %v667
  %v794 = vpack.c.b16 %v672, %v670
  %v795 = vpack.c.b16 %v673, %v671
  %v796 = vpack.c.b16 %v676, %v674
  %v797 = vpack.c.b16 %v677, %v675
  %v798 = vpack.c.b16 %v680, %v678
  %v799 = vpack.c.b16 %v681, %v679
  %v800 = vpack.c.b16 %v684, %v682
  %v801 = vpack.c.b16 %v685, %v683
  %v802 = vpack.c.b16 %v688, %v686
  %v803 = vpack.c.b16 %v689, %v687
  %v804 = vpack.c.b16 %v692, %v690
  %v805 = vpack.c.b16 %v693, %v691
  %v806 = vpack.c.b16 %v696, %v694
  %v807 = vpack.c.b16 %v697, %v695
  %v808 = vpack.c.b16 %v700, %v698
  %v809 = vpack.c.b16 %v701, %v699
  %v810 = vpack.c.b16 %v704, %v702
  %v811 = vpack.c.b16 %v705, %v703
  %v812 = vpack.c.b16 %v708, %v706
  %v813 = vpack.c.b16 %v709, %v707
  %v814 = vpack.c.b16 %v712, %v710
  %v815 = vpack.c.b16 %v713, %v711
  %v816 = vpack.c.b16 %v716, %v714
  %v817 = vpack.c.b16 %v717, %v715
  %v818 = vpack.c.b16 %v720, %v718
  %v819 = vpack.c.b16 %v721, %v719
  %v820 = vpack.c.b16 %v724, %v722
  %v821 = vpack.c.b16 %v725, %v723
  %v822 = vpack.c.b16 %v728, %v726
  %v823 = vpack.c.b16 %v729, %v727
  %v824 = vpack.c.b16 %v732, %v730
  %v825 = vpack.c.b16 %v733, %v731
  %v826 = vpack.c.b16 %v736, %v734
  %v827 = vpack.c.b16 %v737, %v735
  %v828 = vpack.c.b16 %v740, %v738
  %v829 = vpack.c.b16 %v741, %v739
  %v830 = vpack.c.b16 %v744, %v742
  %v831 = vpack.c.b16 %v745, %v743
  %v832 = vpack.c.b16 %v748, %v746
  %v833 = vpack.c.b16 %v749, %v747
  %v834 = vpack.c.b16 %v752, %v750
  %v835 = vpack.c.b16 %v753, %v751
  %v836 = vpack.c.b16 %v756, %v754
  %v837 = vpack.c.b16 %v757, %v755
  %v838 = vpack.c.b16 %v760, %v758
  %v839 = vpack.c.b16 %v761, %v759
  %v840 = vpack.c.b16 %v764, %v762
  %v841 = vpack.c.b16 %v765, %v763
  %v842 = vpack.c.b16 %v768, %v766
  %v843 = vpack.c.b16 %v769, %v767
  %v844 = vpack.c.b16 %v772, %v770
  %v845 = vpack.c.b16 %v773, %v771
  %v846 = vpack.c.b16 %v776, %v774
  %v847 = vpack.c.b16 %v777, %v775
  %v848 = vpack.c.b16 %v780, %v778
  %v849 = vpack.c.b16 %v781, %v779
  %v850 = vpack.c.b16 %v784, %v782
  %v851 = vpack.c.b16 %v785, %v783
  %v852 = vpack.c.b16 %v788, %v786
  %v853 = vpack.c.b16 %v789, %v787
  %918 = vmatprep.subr.bf16.mxu0 %v791
  %919 = vmatpush1.bf16.msra.mxu0 %v790
  %920 = vmatprep.subr.bf16.mxu0 %v793
  %921 = vmatpush1.bf16.msra.mxu0 %v792
  %922 = vmatprep.subr.bf16.mxu0 %v795
  %923 = vmatpush1.bf16.msra.mxu0 %v794
  %924 = vmatprep.subr.bf16.mxu0 %v797
  %925 = vmatpush1.bf16.msra.mxu0 %v796
  %926 = vmatprep.subr.bf16.mxu0 %v799
  %927 = vmatpush1.bf16.msra.mxu0 %v798
  %928 = vmatprep.subr.bf16.mxu0 %v801
  %929 = vmatpush1.bf16.msra.mxu0 %v800
  %930 = vmatprep.subr.bf16.mxu0 %v803
  %931 = vmatpush1.bf16.msra.mxu0 %v802
  %932 = vmatprep.subr.bf16.mxu0 %v805
  %933 = vmatpush1.bf16.msra.mxu0 %v804
  %934 = vmatprep.subr.bf16.mxu0 %v807
  %935 = vmatpush1.bf16.msra.mxu0 %v806
  %936 = vmatprep.subr.bf16.mxu0 %v809
  %937 = vmatpush1.bf16.msra.mxu0 %v808
  %938 = vmatprep.subr.bf16.mxu0 %v811
  %939 = vmatpush1.bf16.msra.mxu0 %v810
  %940 = vmatprep.subr.bf16.mxu0 %v813
  %941 = vmatpush1.bf16.msra.mxu0 %v812
  %942 = vmatprep.subr.bf16.mxu0 %v815
  %943 = vmatpush1.bf16.msra.mxu0 %v814
  %944 = vmatprep.subr.bf16.mxu0 %v817
  %945 = vmatpush1.bf16.msra.mxu0 %v816
  %946 = vmatprep.subr.bf16.mxu0 %v819
  %947 = vmatpush1.bf16.msra.mxu0 %v818
  %948 = vmatprep.subr.bf16.mxu0 %v821
  %949 = vmatpush1.bf16.msra.mxu0 %v820
  %950 = vmatprep.mubr.bf16.mxu0 %v584
  %951 = vmatmul.mubr.bf16.gmra.mrb[0].mxu0 %v583
  %v952 = vpop.f32.mrb[0].mxu0
  %v953 = vadd.f32 %v591, %v952
  %v954 = vpop.f32.mrb[0].mxu0
  %v955 = vadd.f32 %v595, %v954
  %v956 = vpop.f32.mrb[0].mxu0
  %v957 = vpop.f32.mrb[0].mxu0
  %958 = vdwg.mxu0
  %959 = vmatprep.subr.bf16.mxu0 %v823
  %960 = vmatpush1.bf16.msra.mxu0 %v822
  %961 = vmatprep.subr.bf16.mxu0 %v825
  %962 = vmatpush1.bf16.msra.mxu0 %v824
  %963 = vmatprep.subr.bf16.mxu0 %v827
  %964 = vmatpush1.bf16.msra.mxu0 %v826
  %965 = vmatprep.subr.bf16.mxu0 %v829
  %966 = vmatpush1.bf16.msra.mxu0 %v828
  %967 = vmatprep.subr.bf16.mxu0 %v831
  %968 = vmatpush1.bf16.msra.mxu0 %v830
  %969 = vmatprep.subr.bf16.mxu0 %v833
  %970 = vmatpush1.bf16.msra.mxu0 %v832
  %971 = vmatprep.subr.bf16.mxu0 %v835
  %972 = vmatpush1.bf16.msra.mxu0 %v834
  %973 = vmatprep.subr.bf16.mxu0 %v837
  %974 = vmatpush1.bf16.msra.mxu0 %v836
  %975 = vmatprep.subr.bf16.mxu0 %v839
  %976 = vmatpush1.bf16.msra.mxu0 %v838
  %977 = vmatprep.subr.bf16.mxu0 %v841
  %978 = vmatpush1.bf16.msra.mxu0 %v840
  %979 = vmatprep.subr.bf16.mxu0 %v843
  %980 = vmatpush1.bf16.msra.mxu0 %v842
  %981 = vmatprep.subr.bf16.mxu0 %v845
  %982 = vmatpush1.bf16.msra.mxu0 %v844
  %983 = vmatprep.subr.bf16.mxu0 %v847
  %984 = vmatpush1.bf16.msra.mxu0 %v846
  %985 = vmatprep.subr.bf16.mxu0 %v849
  %986 = vmatpush1.bf16.msra.mxu0 %v848
  %987 = vmatprep.subr.bf16.mxu0 %v851
  %988 = vmatpush1.bf16.msra.mxu0 %v850
  %989 = vmatprep.subr.bf16.mxu0 %v853
  %990 = vmatpush1.bf16.msra.mxu0 %v852
  %991 = vmatprep.mubr.bf16.mxu0 %v586
  %992 = vmatmul.mubr.bf16.gmra.mrb[0].mxu0 %v585
  %v993 = vpop.f32.mrb[0].mxu0
  %v994 = vadd.f32 %v953, %v993
  %v995 = vpop.f32.mrb[0].mxu0
  %v996 = vadd.f32 %v955, %v995
  %v997 = vpop.f32.mrb[0].mxu0
  %v998 = vpop.f32.mrb[0].mxu0
  %999 = vdwg.mxu0
  %v1000 = vmul.f32 %v994, 0.2
  %v1001 = vmul.f32 %v996, 0.2
  %v1002 = vmax.f32 %v994, %v1000
  %v1003 = vmax.f32 %v996, %v1001
  %v1004 = vld [vmem:[%s1 + $0x600] sm:$0xf]
  %v1005 = vld [vmem:[%s1 + $0x610] sm:$0xf]
  %v1006 = vld [vmem:[%s1 + $0x620] sm:$0xf]
  %v1007 = vld [vmem:[%s1 + $0x630] sm:$0xf]
  %v1008 = vld [vmem:[%s1 + $0x640] sm:$0xf]
  %v1009 = vld [vmem:[%s1 + $0x650] sm:$0xf]
  %v1010 = vld [vmem:[%s1 + $0x660] sm:$0xf]
  %v1011 = vld [vmem:[%s1 + $0x670] sm:$0xf]
  %v1012 = vld [vmem:[%s1 + $0x680] sm:$0xf]
  %v1013 = vld [vmem:[%s1 + $0x690] sm:$0xf]
  %v1014 = vld [vmem:[%s1 + $0x6a0] sm:$0xf]
  %v1015 = vld [vmem:[%s1 + $0x6b0] sm:$0xf]
  %v1016 = vld [vmem:[%s1 + $0x6c0] sm:$0xf]
  %v1017 = vld [vmem:[%s1 + $0x6d0] sm:$0xf]
  %v1018 = vld [vmem:[%s1 + $0x6e0] sm:$0xf]
  %v1019 = vld [vmem:[%s1 + $0x6f0] sm:$0xf]
  %v1020 = vld [vmem:[%s1 + $0x700] sm:$0xf]
  %v1021 = vld [vmem:[%s1 + $0x710] sm:$0xf]
  %v1022 = vld [vmem:[%s1 + $0x720] sm:$0xf]
  %v1023 = vld [vmem:[%s1 + $0x730] sm:$0xf]
  %v1024 = vld [vmem:[%s1 + $0x740] sm:$0xf]
  %v1025 = vld [vmem:[%s1 + $0x750] sm:$0xf]
  %v1026 = vld [vmem:[%s1 + $0x760] sm:$0xf]
  %v1027 = vld [vmem:[%s1 + $0x770] sm:$0xf]
  %v1028 = vld [vmem:[%s1 + $0x780] sm:$0xf]
  %v1029 = vld [vmem:[%s1 + $0x790] sm:$0xf]
  %v1030 = vld [vmem:[%s1 + $0x7a0] sm:$0xf]
  %v1031 = vld [vmem:[%s1 + $0x7b0] sm:$0xf]
  %v1032 = vld [vmem:[%s1 + $0x7c0] sm:$0xf]
  %v1033 = vld [vmem:[%s1 + $0x7d0] sm:$0xf]
  %v1034 = vld [vmem:[%s1 + $0x7e0] sm:$0xf]
  %v1035 = vld [vmem:[%s1 + $0x7f0] sm:$0xf]
  %v1036 = vld [vmem:[%s2 + $0x2] ss:$0 sm:$0xff]
  %v1037 = vpack.c.bf16 %v1002, %v1002
  %v1038 = vpack.c.bf16 %v1003, %v1003
  %v1071 = vunpack.c.l.b16 %v1004
  %v1072 = vunpack.c.l.b16 %v1005
  %v1073 = vunpack.c.l.b16 %v1006
  %v1074 = vunpack.c.l.b16 %v1007
  %v1075 = vunpack.c.l.b16 %v1008
  %v1076 = vunpack.c.l.b16 %v1009
  %v1077 = vunpack.c.l.b16 %v1010
  %v1078 = vunpack.c.l.b16 %v1011
  %v1079 = vunpack.c.l.b16 %v1012
  %v1080 = vunpack.c.l.b16 %v1013
  %v1081 = vunpack.c.l.b16 %v1014
  %v1082 = vunpack.c.l.b16 %v1015
  %v1083 = vunpack.c.l.b16 %v1016
  %v1084 = vunpack.c.l.b16 %v1017
  %v1085 = vunpack.c.l.b16 %v1018
  %v1086 = vunpack.c.l.b16 %v1019
  %v1087 = vunpack.c.l.b16 %v1020
  %v1088 = vunpack.c.l.b16 %v1021
  %v1089 = vunpack.c.l.b16 %v1022
  %v1090 = vunpack.c.l.b16 %v1023
  %v1091 = vunpack.c.l.b16 %v1024
  %v1092 = vunpack.c.l.b16 %v1025
  %v1093 = vunpack.c.l.b16 %v1026
  %v1094 = vunpack.c.l.b16 %v1027
  %v1095 = vunpack.c.l.b16 %v1028
  %v1096 = vunpack.c.l.b16 %v1029
  %v1097 = vunpack.c.l.b16 %v1030
  %v1098 = vunpack.c.l.b16 %v1031
  %v1099 = vunpack.c.l.b16 %v1032
  %v1100 = vunpack.c.l.b16 %v1033
  %v1101 = vunpack.c.l.b16 %v1034
  %v1102 = vunpack.c.l.b16 %v1035
  %v1103 = vpack.c.b16 %v1072, %v1071
  %v1104 = vpack.c.b16 %v1074, %v1073
  %v1105 = vpack.c.b16 %v1076, %v1075
  %v1106 = vpack.c.b16 %v1078, %v1077
  %v1107 = vpack.c.b16 %v1080, %v1079
  %v1108 = vpack.c.b16 %v1082, %v1081
  %v1109 = vpack.c.b16 %v1084, %v1083
  %v1110 = vpack.c.b16 %v1086, %v1085
  %v1111 = vpack.c.b16 %v1088, %v1087
  %v1112 = vpack.c.b16 %v1090, %v1089
  %v1113 = vpack.c.b16 %v1092, %v1091
  %v1114 = vpack.c.b16 %v1094, %v1093
  %v1115 = vpack.c.b16 %v1096, %v1095
  %v1116 = vpack.c.b16 %v1098, %v1097
  %v1117 = vpack.c.b16 %v1100, %v1099
  %v1118 = vpack.c.b16 %v1102, %v1101
  %1135 = vmatprep.subr.bf16.mxu0 0
  %1136 = vmatpush1.bf16.msra.mxu0 %v1103
  %1137 = vmatprep.subr.bf16.mxu0 0
  %1138 = vmatpush1.bf16.msra.mxu0 %v1104
  %1139 = vmatprep.subr.bf16.mxu0 0
  %1140 = vmatpush1.bf16.msra.mxu0 %v1105
  %1141 = vmatprep.subr.bf16.mxu0 0
  %1142 = vmatpush1.bf16.msra.mxu0 %v1106
  %1143 = vmatprep.subr.bf16.mxu0 0
  %1144 = vmatpush1.bf16.msra.mxu0 %v1107
  %1145 = vmatprep.subr.bf16.mxu0 0
  %1146 = vmatpush1.bf16.msra.mxu0 %v1108
  %1147 = vmatprep.subr.bf16.mxu0 0
  %1148 = vmatpush1.bf16.msra.mxu0 %v1109
  %1149 = vmatprep.subr.bf16.mxu0 0
  %1150 = vmatpush1.bf16.msra.mxu0 %v1110
  %1151 = vmatprep.subr.bf16.mxu0 0
  %1152 = vmatpush1.bf16.msra.mxu0 %v1111
  %1153 = vmatprep.subr.bf16.mxu0 0
  %1154 = vmatpush1.bf16.msra.mxu0 %v1112
  %1155 = vmatprep.subr.bf16.mxu0 0
  %1156 = vmatpush1.bf16.msra.mxu0 %v1113
  %1157 = vmatprep.subr.bf16.mxu0 0
  %1158 = vmatpush1.bf16.msra.mxu0 %v1114
  %1159 = vmatprep.subr.bf16.mxu0 0
  %1160 = vmatpush1.bf16.msra.mxu0 %v1115
  %1161 = vmatprep.subr.bf16.mxu0 0
  %1162 = vmatpush1.bf16.msra.mxu0 %v1116
  %1163 = vmatprep.subr.bf16.mxu0 0
  %1164 = vmatpush1.bf16.msra.mxu0 %v1117
  %1165 = vmatprep.subr.bf16.mxu0 0
  %1166 = vmatpush1.bf16.msra.mxu0 %v1118
  %1167 = vmatprep.mubr.bf16.mxu0 %v1038
  %1168 = vmatmul.mubr.bf16.gmra.mrb[0].mxu0 %v1037
  %v1169 = vpop.f32.mrb[0].mxu0
  %v1170 = vadd.f32 %v1036, %v1169
  %v1171 = vpop.f32.mrb[0].mxu0
  %v1172 = vpop.f32.mrb[0].mxu0
  %v1173 = vpop.f32.mrb[0].mxu0
  %1174 = vdwg.mxu0
  %v1175 = vmul.f32 %v1170, 0.2
  %v1176 = vmax.f32 %v1170, %v1175
  %v1177 = vld [vmem:[%s1 + $0x800] sm:$0xf]
  %v1178 = vld [vmem:[%s1 + $0x810] sm:$0xf]
  %v1179 = vld [vmem:[%s1 + $0x820] sm:$0xf]
  %v1180 = vld [vmem:[%s1 + $0x830] sm:$0xf]
  %v1181 = vld [vmem:[%s1 + $0x840] sm:$0xf]
  %v1182 = vld [vmem:[%s1 + $0x850] sm:$0xf]
  %v1183 = vld [vmem:[%s1 + $0x860] sm:$0xf]
  %v1184 = vld [vmem:[%s1 + $0x870] sm:$0xf]
  %v1185 = vld [vmem:[%s1 + $0x880] sm:$0xf]
  %v1186 = vld [vmem:[%s1 + $0x890] sm:$0xf]
  %v1187 = vld [vmem:[%s1 + $0x8a0] sm:$0xf]
  %v1188 = vld [vmem:[%s1 + $0x8b0] sm:$0xf]
  %v1189 = vld [vmem:[%s1 + $0x8c0] sm:$0xf]
  %v1190 = vld [vmem:[%s1 + $0x8d0] sm:$0xf]
  %v1191 = vld [vmem:[%s1 + $0x8e0] sm:$0xf]
  %v1192 = vld [vmem:[%s1 + $0x8f0] sm:$0xf]
  %v1193 = vld [vmem:[%s2 + $0x3] ss:$0 sm:$0xff]
  %v1194 = vpack.c.bf16 %v1176, %v1176
  %v1211 = vunpack.c.l.b16 %v1177
  %v1212 = vunpack.c.l.b16 %v1178
  %v1213 = vunpack.c.l.b16 %v1179
  %v1214 = vunpack.c.l.b16 %v1180
  %v1215 = vunpack.c.l.b16 %v1181
  %v1216 = vunpack.c.l.b16 %v1182
  %v1217 = vunpack.c.l.b16 %v1183
  %v1218 = vunpack.c.l.b16 %v1184
  %v1219 = vunpack.c.l.b16 %v1185
  %v1220 = vunpack.c.l.b16 %v1186
  %v1221 = vunpack.c.l.b16 %v1187
  %v1222 = vunpack.c.l.b16 %v1188
  %v1223 = vunpack.c.l.b16 %v1189
  %v1224 = vunpack.c.l.b16 %v1190
  %v1225 = vunpack.c.l.b16 %v1191
  %v1226 = vunpack.c.l.b16 %v1192
  %v1227 = vpack.c.b16 %v1212, %v1211
  %v1228 = vpack.c.b16 %v1214, %v1213
  %v1229 = vpack.c.b16 %v1216, %v1215
  %v1230 = vpack.c.b16 %v1218, %v1217
  %v1231 = vpack.c.b16 %v1220, %v1219
  %v1232 = vpack.c.b16 %v1222, %v1221
  %v1233 = vpack.c.b16 %v1224, %v1223
  %v1234 = vpack.c.b16 %v1226, %v1225
  %1243 = vmatprep.subr.bf16.mxu0 0
  %1244 = vmatpush1.bf16.msra.mxu0 %v1227
  %1245 = vmatprep.subr.bf16.mxu0 0
  %1246 = vmatpush1.bf16.msra.mxu0 %v1228
  %1247 = vmatprep.subr.bf16.mxu0 0
  %1248 = vmatpush1.bf16.msra.mxu0 %v1229
  %1249 = vmatprep.subr.bf16.mxu0 0
  %1250 = vmatpush1.bf16.msra.mxu0 %v1230
  %1251 = vmatprep.subr.bf16.mxu0 0
  %1252 = vmatpush1.bf16.msra.mxu0 %v1231
  %1253 = vmatprep.subr.bf16.mxu0 0
  %1254 = vmatpush1.bf16.msra.mxu0 %v1232
  %1255 = vmatprep.subr.bf16.mxu0 0
  %1256 = vmatpush1.bf16.msra.mxu0 %v1233
  %1257 = vmatprep.subr.bf16.mxu0 0
  %1258 = vmatpush1.bf16.msra.mxu0 %v1234
  %1259 = vmatprep.subr.bf16.mxu0 0
  %1260 = vmatpush1.bf16.msra.mxu0 0
  %1261 = vmatprep.subr.bf16.mxu0 0
  %1262 = vmatpush1.bf16.msra.mxu0 0
  %1263 = vmatprep.subr.bf16.mxu0 0
  %1264 = vmatpush1.bf16.msra.mxu0 0
  %1265 = vmatprep.subr.bf16.mxu0 0
  %1266 = vmatpush1.bf16.msra.mxu0 0
  %1267 = vmatprep.subr.bf16.mxu0 0
  %1268 = vmatpush1.bf16.msra.mxu0 0
  %1269 = vmatprep.subr.bf16.mxu0 0
  %1270 = vmatpush1.bf16.msra.mxu0 0
  %1271 = vmatprep.subr.bf16.mxu0 0
  %1272 = vmatpush1.bf16.msra.mxu0 0
  %1273 = vmatprep.subr.bf16.mxu0 0
  %1274 = vmatpush1.bf16.msra.mxu0 0
  %1275 = vmatprep.mubr.bf16.mxu0 0
  %1276 = vmatmul.mubr.bf16.gmra.mrb[0].mxu0 %v1194
  %v1277 = vpop.f32.mrb[0].mxu0
  %v1278 = vadd.f32 %v1193, %v1277
  %v1279 = vpop.f32.mrb[0].mxu0
  %v1280 = vpop.f32.mrb[0].mxu0
  %v1281 = vpop.f32.mrb[0].mxu0
  %1282 = vdwg.mxu0
  %v1283 = vmul.f32 %v1278, 0.2
  %v1284 = vmax.f32 %v1278, %v1283
  %v1285 = vld [vmem:[%s1 + $0x900] sm:$0xf]
  %v1286 = vld [vmem:[%s1 + $0x910] sm:$0xf]
  %v1287 = vld [vmem:[%s1 + $0x920] sm:$0xf]
  %v1288 = vld [vmem:[%s1 + $0x930] sm:$0xf]
  %v1289 = vld [vmem:[%s1 + $0x940] sm:$0xf]
  %v1290 = vld [vmem:[%s1 + $0x950] sm:$0xf]
  %v1291 = vld [vmem:[%s1 + $0x960] sm:$0xf]
  %v1292 = vld [vmem:[%s1 + $0x970] sm:$0xf]
  %v1293 = vld [vmem:[%s2 + $0x4] ss:$0 sm:$0xff]
  %v1294 = vpack.c.bf16 %v1284, %v1284
  %v1303 = vunpack.c.l.b16 %v1285
  %v1304 = vunpack.c.l.b16 %v1286
  %v1305 = vunpack.c.l.b16 %v1287
  %v1306 = vunpack.c.l.b16 %v1288
  %v1307 = vunpack.c.l.b16 %v1289
  %v1308 = vunpack.c.l.b16 %v1290
  %v1309 = vunpack.c.l.b16 %v1291
  %v1310 = vunpack.c.l.b16 %v1292
  %v1311 = vpack.c.b16 %v1304, %v1303
  %v1312 = vpack.c.b16 %v1306, %v1305
  %v1313 = vpack.c.b16 %v1308, %v1307
  %v1314 = vpack.c.b16 %v1310, %v1309
  %vm1319 = vcmask 523264
  %v1321 = vsel %vm1319, %v1294, 0
  %1323 = vmatprep.subr.bf16.mxu0 0
  %1324 = vmatpush1.bf16.msra.mxu0 %v1311
  %1325 = vmatprep.subr.bf16.mxu0 0
  %1326 = vmatpush1.bf16.msra.mxu0 %v1312
  %1327 = vmatprep.subr.bf16.mxu0 0
  %1328 = vmatpush1.bf16.msra.mxu0 %v1313
  %1329 = vmatprep.subr.bf16.mxu0 0
  %1330 = vmatpush1.bf16.msra.mxu0 %v1314
  %1331 = vmatprep.subr.bf16.mxu0 0
  %1332 = vmatpush1.bf16.msra.mxu0 0
  %1333 = vmatprep.subr.bf16.mxu0 0
  %1334 = vmatpush1.bf16.msra.mxu0 0
  %1335 = vmatprep.subr.bf16.mxu0 0
  %1336 = vmatpush1.bf16.msra.mxu0 0
  %1337 = vmatprep.subr.bf16.mxu0 0
  %1338 = vmatpush1.bf16.msra.mxu0 0
  %1339 = vmatprep.subr.bf16.mxu0 0
  %1340 = vmatpush1.bf16.msra.mxu0 0
  %1341 = vmatprep.subr.bf16.mxu0 0
  %1342 = vmatpush1.bf16.msra.mxu0 0
  %1343 = vmatprep.subr.bf16.mxu0 0
  %1344 = vmatpush1.bf16.msra.mxu0 0
  %1345 = vmatprep.subr.bf16.mxu0 0
  %1346 = vmatpush1.bf16.msra.mxu0 0
  %1347 = vmatprep.subr.bf16.mxu0 0
  %1348 = vmatpush1.bf16.msra.mxu0 0
  %1349 = vmatprep.subr.bf16.mxu0 0
  %1350 = vmatpush1.bf16.msra.mxu0 0
  %1351 = vmatprep.subr.bf16.mxu0 0
  %1352 = vmatpush1.bf16.msra.mxu0 0
  %1353 = vmatprep.subr.bf16.mxu0 0
  %1354 = vmatpush1.bf16.msra.mxu0 0
  %1355 = vmatprep.mubr.bf16.mxu0 0
  %1356 = vmatmul.mubr.bf16.gmra.mrb[0].mxu0 %v1321
  %v1357 = vpop.f32.mrb[0].mxu0
  %v1358 = vadd.f32 %v1293, %v1357
  %v1359 = vpop.f32.mrb[0].mxu0
  %v1360 = vpop.f32.mrb[0].mxu0
  %v1361 = vpop.f32.mrb[0].mxu0
  %1362 = vdwg.mxu0
  %v1363 = vmul.f32 %v1358, 0.2
  %v1364 = vmax.f32 %v1358, %v1363
  %v1365 = vld [vmem:[%s1 + $0x980] sm:$0xf]
  %v1366 = vld [vmem:[%s1 + $0x990] sm:$0xf]
  %v1367 = vld [vmem:[%s1 + $0x9a0] sm:$0xf]
  %v1368 = vld [vmem:[%s1 + $0x9b0] sm:$0xf]
  %v1369 = vld [vmem:[%s2 + $0x5] ss:$0 sm:$0xff]
  %v1370 = vpack.c.bf16 %v1364, %v1364
  %v1375 = vunpack.c.l.b16 %v1365
  %v1376 = vunpack.c.l.b16 %v1366
  %v1377 = vunpack.c.l.b16 %v1367
  %v1378 = vunpack.c.l.b16 %v1368
  %v1379 = vpack.c.b16 %v1376, %v1375
  %v1380 = vpack.c.b16 %v1378, %v1377
  %vm1383 = vcmask 261120
  %v1385 = vsel %vm1383, %v1370, 0
  %1387 = vmatprep.subr.bf16.mxu0 0
  %1388 = vmatpush1.bf16.msra.mxu0 %v1379
  %1389 = vmatprep.subr.bf16.mxu0 0
  %1390 = vmatpush1.bf16.msra.mxu0 %v1380
  %1391 = vmatprep.subr.bf16.mxu0 0
  %1392 = vmatpush1.bf16.msra.mxu0 0
  %1393 = vmatprep.subr.bf16.mxu0 0
  %1394 = vmatpush1.bf16.msra.mxu0 0
  %1395 = vmatprep.subr.bf16.mxu0 0
  %1396 = vmatpush1.bf16.msra.mxu0 0
  %1397 = vmatprep.subr.bf16.mxu0 0
  %1398 = vmatpush1.bf16.msra.mxu0 0
  %1399 = vmatprep.subr.bf16.mxu0 0
  %1400 = vmatpush1.bf16.msra.mxu0 0
  %1401 = vmatprep.subr.bf16.mxu0 0
  %1402 = vmatpush1.bf16.msra.mxu0 0
  %1403 = vmatprep.subr.bf16.mxu0 0
  %1404 = vmatpush1.bf16.msra.mxu0 0
  %1405 = vmatprep.subr.bf16.mxu0 0
  %1406 = vmatpush1.bf16.msra.mxu0 0
  %1407 = vmatprep.subr.bf16.mxu0 0
  %1408 = vmatpush1.bf16.msra.mxu0 0
  %1409 = vmatprep.subr.bf16.mxu0 0
  %1410 = vmatpush1.bf16.msra.mxu0 0
  %1411 = vmatprep.subr.bf16.mxu0 0
  %1412 = vmatpush1.bf16.msra.mxu0 0
  %1413 = vmatprep.subr.bf16.mxu0 0
  %1414 = vmatpush1.bf16.msra.mxu0 0
  %1415 = vmatprep.subr.bf16.mxu0 0
  %1416 = vmatpush1.bf16.msra.mxu0 0
  %1417 = vmatprep.subr.bf16.mxu0 0
  %1418 = vmatpush1.bf16.msra.mxu0 0
  %1419 = vmatprep.mubr.bf16.mxu0 0
  %1420 = vmatmul.mubr.bf16.gmra.mrb[0].mxu0 %v1385
  %v1421 = vpop.f32.mrb[0].mxu0
  %v1422 = vadd.f32 %v1369, %v1421
  %v1423 = vpop.f32.mrb[0].mxu0
  %v1424 = vpop.f32.mrb[0].mxu0
  %v1425 = vpop.f32.mrb[0].mxu0
  %1426 = vdwg.mxu0
  %v1427 = vmul.f32 %v1422, 0.2
  %v1428 = vmax.f32 %v1422, %v1427
  %v1429 = vld [vmem:[%s1 + $0x9c0] sm:$0xf]
  %v1430 = vld [vmem:[%s1 + $0x9d0] sm:$0xf]
  %v1431 = vld [vmem:[%s2 + $0x6] ss:$0 sm:$0xff]
  %v1432 = vpack.c.bf16 %v1428, %v1428
  %v1435 = vunpack.c.l.b16 %v1429
  %v1436 = vunpack.c.l.b16 %v1430
  %v1437 = vpack.c.b16 %v1436, %v1435
  %vm1439 = vcmask 130048
  %v1441 = vsel %vm1439, %v1432, 0
  %1443 = vmatprep.subr.bf16.mxu0 0
  %1444 = vmatpush1.bf16.msra.mxu0 %v1437
  %1445 = vmatprep.subr.bf16.mxu0 0
  %1446 = vmatpush1.bf16.msra.mxu0 0
  %1447 = vmatprep.subr.bf16.mxu0 0
  %1448 = vmatpush1.bf16.msra.mxu0 0
  %1449 = vmatprep.subr.bf16.mxu0 0
  %1450 = vmatpush1.bf16.msra.mxu0 0
  %1451 = vmatprep.subr.bf16.mxu0 0
  %1452 = vmatpush1.bf16.msra.mxu0 0
  %1453 = vmatprep.subr.bf16.mxu0 0
  %1454 = vmatpush1.bf16.msra.mxu0 0
  %1455 = vmatprep.subr.bf16.mxu0 0
  %1456 = vmatpush1.bf16.msra.mxu0 0
  %1457 = vmatprep.subr.bf16.mxu0 0
  %1458 = vmatpush1.bf16.msra.mxu0 0
  %1459 = vmatprep.subr.bf16.mxu0 0
  %1460 = vmatpush1.bf16.msra.mxu0 0
  %1461 = vmatprep.subr.bf16.mxu0 0
  %1462 = vmatpush1.bf16.msra.mxu0 0
  %1463 = vmatprep.subr.bf16.mxu0 0
  %1464 = vmatpush1.bf16.msra.mxu0 0
  %1465 = vmatprep.subr.bf16.mxu0 0
  %1466 = vmatpush1.bf16.msra.mxu0 0
  %1467 = vmatprep.subr.bf16.mxu0 0
  %1468 = vmatpush1.bf16.msra.mxu0 0
  %1469 = vmatprep.subr.bf16.mxu0 0
  %1470 = vmatpush1.bf16.msra.mxu0 0
  %1471 = vmatprep.subr.bf16.mxu0 0
  %1472 = vmatpush1.bf16.msra.mxu0 0
  %1473 = vmatprep.subr.bf16.mxu0 0
  %1474 = vmatpush1.bf16.msra.mxu0 0
  %1475 = vmatprep.mubr.bf16.mxu0 0
  %1476 = vmatmul.mubr.bf16.gmra.mrb[0].mxu0 %v1441
  %v1477 = vpop.f32.mrb[0].mxu0
  %v1478 = vadd.f32 %v1431, %v1477
  %v1479 = vpop.f32.mrb[0].mxu0
  %v1480 = vpop.f32.mrb[0].mxu0
  %v1481 = vpop.f32.mrb[0].mxu0
  %1482 = vdwg.mxu0
  %v1483 = vmul.f32 %v1478, 0.2
  %v1484 = vmax.f32 %v1478, %v1483
  %v1485 = vld [vmem:[%s1 + $0x9e0] sm:$0xf]
  %v1486 = vld [vmem:[%s1 + $0x9f0] sm:$0xf]
  %v1487 = vld [vmem:[%s1 + $0xa00] sm:$0xf]
  %v1488 = vld [vmem:[%s1 + $0xa10] sm:$0xf]
  %v1489 = vld [vmem:[%s2 + $0x7] ss:$0 sm:$0xff]
  %v1490 = vpack.c.bf16 %v1484, %v1484
  %v1495 = vunpack.c.l.b16 %v1485
  %v1496 = vunpack.c.l.b16 %v1486
  %v1497 = vunpack.c.l.b16 %v1487
  %v1498 = vunpack.c.l.b16 %v1488
  %v1499 = vpack.c.b16 %v1496, %v1495
  %v1500 = vpack.c.b16 %v1498, %v1497
  %v1504 = vsel %vm1383, %v1490, 0
  %1506 = vmatprep.subr.bf16.mxu0 0
  %1507 = vmatpush1.bf16.msra.mxu0 %v1499
  %1508 = vmatprep.subr.bf16.mxu0 0
  %1509 = vmatpush1.bf16.msra.mxu0 %v1500
  %1510 = vmatprep.subr.bf16.mxu0 0
  %1511 = vmatpush1.bf16.msra.mxu0 0
  %1512 = vmatprep.subr.bf16.mxu0 0
  %1513 = vmatpush1.bf16.msra.mxu0 0
  %1514 = vmatprep.subr.bf16.mxu0 0
  %1515 = vmatpush1.bf16.msra.mxu0 0
  %1516 = vmatprep.subr.bf16.mxu0 0
  %1517 = vmatpush1.bf16.msra.mxu0 0
  %1518 = vmatprep.subr.bf16.mxu0 0
  %1519 = vmatpush1.bf16.msra.mxu0 0
  %1520 = vmatprep.subr.bf16.mxu0 0
  %1521 = vmatpush1.bf16.msra.mxu0 0
  %1522 = vmatprep.subr.bf16.mxu0 0
  %1523 = vmatpush1.bf16.msra.mxu0 0
  %1524 = vmatprep.subr.bf16.mxu0 0
  %1525 = vmatpush1.bf16.msra.mxu0 0
  %1526 = vmatprep.subr.bf16.mxu0 0
  %1527 = vmatpush1.bf16.msra.mxu0 0
  %1528 = vmatprep.subr.bf16.mxu0 0
  %1529 = vmatpush1.bf16.msra.mxu0 0
  %1530 = vmatprep.subr.bf16.mxu0 0
  %1531 = vmatpush1.bf16.msra.mxu0 0
  %1532 = vmatprep.subr.bf16.mxu0 0
  %1533 = vmatpush1.bf16.msra.mxu0 0
  %1534 = vmatprep.subr.bf16.mxu0 0
  %1535 = vmatpush1.bf16.msra.mxu0 0
  %1536 = vmatprep.subr.bf16.mxu0 0
  %1537 = vmatpush1.bf16.msra.mxu0 0
  %1538 = vmatprep.mubr.bf16.mxu0 0
  %1539 = vmatmul.mubr.bf16.gmra.mrb[0].mxu0 %v1504
  %v1540 = vpop.f32.mrb[0].mxu0
  %v1541 = vadd.f32 %v1489, %v1540
  %v1542 = vpop.f32.mrb[0].mxu0
  %v1543 = vpop.f32.mrb[0].mxu0
  %v1544 = vpop.f32.mrb[0].mxu0
  %1545 = vdwg.mxu0
  %v1546 = vmul.f32 %v1541, 0.2
  %v1547 = vmax.f32 %v1541, %v1546
  %v1548 = vld [vmem:[%s1 + $0xa20] sm:$0xf]
  %v1549 = vld [vmem:[%s1 + $0xa30] sm:$0xf]
  %v1550 = vld [vmem:[%s1 + $0xa40] sm:$0xf]
  %v1551 = vld [vmem:[%s1 + $0xa50] sm:$0xf]
  %v1552 = vld [vmem:[%s1 + $0xa60] sm:$0xf]
  %v1553 = vld [vmem:[%s1 + $0xa70] sm:$0xf]
  %v1554 = vld [vmem:[%s1 + $0xa80] sm:$0xf]
  %v1555 = vld [vmem:[%s1 + $0xa90] sm:$0xf]
  %v1556 = vld [vmem:[%s2 + $0x20] ss:$0 sm:$0xff]
  %v1557 = vpack.c.bf16 %v1547, %v1547
  %v1566 = vunpack.c.l.b16 %v1548
  %v1567 = vunpack.c.l.b16 %v1549
  %v1568 = vunpack.c.l.b16 %v1550
  %v1569 = vunpack.c.l.b16 %v1551
  %v1570 = vunpack.c.l.b16 %v1552
  %v1571 = vunpack.c.l.b16 %v1553
  %v1572 = vunpack.c.l.b16 %v1554
  %v1573 = vunpack.c.l.b16 %v1555
  %v1574 = vpack.c.b16 %v1567, %v1566
  %v1575 = vpack.c.b16 %v1569, %v1568
  %v1576 = vpack.c.b16 %v1571, %v1570
  %v1577 = vpack.c.b16 %v1573, %v1572
  %v1583 = vsel %vm1319, %v1557, 0
  %1585 = vmatprep.subr.bf16.mxu0 0
  %1586 = vmatpush1.bf16.msra.mxu0 %v1574
  %1587 = vmatprep.subr.bf16.mxu0 0
  %1588 = vmatpush1.bf16.msra.mxu0 %v1575
  %1589 = vmatprep.subr.bf16.mxu0 0
  %1590 = vmatpush1.bf16.msra.mxu0 %v1576
  %1591 = vmatprep.subr.bf16.mxu0 0
  %1592 = vmatpush1.bf16.msra.mxu0 %v1577
  %1593 = vmatprep.subr.bf16.mxu0 0
  %1594 = vmatpush1.bf16.msra.mxu0 0
  %1595 = vmatprep.subr.bf16.mxu0 0
  %1596 = vmatpush1.bf16.msra.mxu0 0
  %1597 = vmatprep.subr.bf16.mxu0 0
  %1598 = vmatpush1.bf16.msra.mxu0 0
  %1599 = vmatprep.subr.bf16.mxu0 0
  %1600 = vmatpush1.bf16.msra.mxu0 0
  %1601 = vmatprep.subr.bf16.mxu0 0
  %1602 = vmatpush1.bf16.msra.mxu0 0
  %1603 = vmatprep.subr.bf16.mxu0 0
  %1604 = vmatpush1.bf16.msra.mxu0 0
  %1605 = vmatprep.subr.bf16.mxu0 0
  %1606 = vmatpush1.bf16.msra.mxu0 0
  %1607 = vmatprep.subr.bf16.mxu0 0
  %1608 = vmatpush1.bf16.msra.mxu0 0
  %1609 = vmatprep.subr.bf16.mxu0 0
  %1610 = vmatpush1.bf16.msra.mxu0 0
  %1611 = vmatprep.subr.bf16.mxu0 0
  %1612 = vmatpush1.bf16.msra.mxu0 0
  %1613 = vmatprep.subr.bf16.mxu0 0
  %1614 = vmatpush1.bf16.msra.mxu0 0
  %1615 = vmatprep.subr.bf16.mxu0 0
  %1616 = vmatpush1.bf16.msra.mxu0 0
  %1617 = vmatprep.mubr.bf16.mxu0 0
  %1618 = vmatmul.mubr.bf16.gmra.mrb[0].mxu0 %v1583
  %v1619 = vpop.f32.mrb[0].mxu0
  %v1620 = vadd.f32 %v1556, %v1619
  %v1621 = vpop.f32.mrb[0].mxu0
  %v1622 = vpop.f32.mrb[0].mxu0
  %v1623 = vpop.f32.mrb[0].mxu0
  %1624 = vdwg.mxu0
  %v1625 = vmul.f32 %v1620, 0.2
  %v1626 = vmax.f32 %v1620, %v1625
  %v1627 = vld [vmem:[%s1 + $0xaa0] sm:$0xff]
  %v1628 = vld [vmem:[%s1 + $0xab0] sm:$0xff]
  %v1629 = vld [vmem:[%s1 + $0xac0] sm:$0xff]
  %v1630 = vld [vmem:[%s1 + $0xad0] sm:$0xff]
  %v1631 = vld [vmem:[%s1 + $0xae0] sm:$0xff]
  %v1632 = vld [vmem:[%s1 + $0xaf0] sm:$0xff]
  %v1633 = vld [vmem:[%s1 + $0xb00] sm:$0xff]
  %v1634 = vld [vmem:[%s1 + $0xb10] sm:$0xff]
  %v1635 = vld [vmem:[%s1 + $0xb20] sm:$0xff]
  %v1636 = vld [vmem:[%s1 + $0xb30] sm:$0xff]
  %v1637 = vld [vmem:[%s1 + $0xb40] sm:$0xff]
  %v1638 = vld [vmem:[%s1 + $0xb50] sm:$0xff]
  %v1639 = vld [vmem:[%s1 + $0xb60] sm:$0xff]
  %v1640 = vld [vmem:[%s1 + $0xb70] sm:$0xff]
  %v1641 = vld [vmem:[%s1 + $0xb80] sm:$0xff]
  %v1642 = vld [vmem:[%s1 + $0xb90] sm:$0xff]
  %s1643 = scalar_lea.vmem %s2, 33
  %v1644 = vld [vmem:[%s1643] ss:$8 sm:$0x3]
  %v1645 = vpack.c.bf16 %v1626, %v1626
  %v1647 = vlaneseq
  %v1648 = vshrl.u32 %v1647, 7
  %v1649 = vsub.s32 0, %v1648
  %v1650 = vrot.slane %v1644, %v1649
  %v1651 = vlaneseq
  %v1652 = vshrl.u32 %v1651, 7
  %v1653 = vsub.s32 1, %v1652
  %v1654 = vrot.slane %v1644, %v1653
  %v1673 = vunpack.c.l.b16 %v1627
  %v1674 = vunpack.c.h.b16 %v1627
  %v1675 = vunpack.c.l.b16 %v1628
  %v1676 = vunpack.c.h.b16 %v1628
  %v1677 = vunpack.c.l.b16 %v1629
  %v1678 = vunpack.c.h.b16 %v1629
  %v1679 = vunpack.c.l.b16 %v1630
  %v1680 = vunpack.c.h.b16 %v1630
  %v1681 = vunpack.c.l.b16 %v1631
  %v1682 = vunpack.c.h.b16 %v1631
  %v1683 = vunpack.c.l.b16 %v1632
  %v1684 = vunpack.c.h.b16 %v1632
  %v1685 = vunpack.c.l.b16 %v1633
  %v1686 = vunpack.c.h.b16 %v1633
  %v1687 = vunpack.c.l.b16 %v1634
  %v1688 = vunpack.c.h.b16 %v1634
  %v1689 = vunpack.c.l.b16 %v1635
  %v1690 = vunpack.c.h.b16 %v1635
  %v1691 = vunpack.c.l.b16 %v1636
  %v1692 = vunpack.c.h.b16 %v1636
  %v1693 = vunpack.c.l.b16 %v1637
  %v1694 = vunpack.c.h.b16 %v1637
  %v1695 = vunpack.c.l.b16 %v1638
  %v1696 = vunpack.c.h.b16 %v1638
  %v1697 = vunpack.c.l.b16 %v1639
  %v1698 = vunpack.c.h.b16 %v1639
  %v1699 = vunpack.c.l.b16 %v1640
  %v1700 = vunpack.c.h.b16 %v1640
  %v1701 = vunpack.c.l.b16 %v1641
  %v1702 = vunpack.c.h.b16 %v1641
  %v1703 = vunpack.c.l.b16 %v1642
  %v1704 = vunpack.c.h.b16 %v1642
  %v1705 = vpack.c.b16 %v1675, %v1673
  %v1706 = vpack.c.b16 %v1676, %v1674
  %v1707 = vpack.c.b16 %v1679, %v1677
  %v1708 = vpack.c.b16 %v1680, %v1678
  %v1709 = vpack.c.b16 %v1683, %v1681
  %v1710 = vpack.c.b16 %v1684, %v1682
  %v1711 = vpack.c.b16 %v1687, %v1685
  %v1712 = vpack.c.b16 %v1688, %v1686
  %v1713 = vpack.c.b16 %v1691, %v1689
  %v1714 = vpack.c.b16 %v1692, %v1690
  %v1715 = vpack.c.b16 %v1695, %v1693
  %v1716 = vpack.c.b16 %v1696, %v1694
  %v1717 = vpack.c.b16 %v1699, %v1697
  %v1718 = vpack.c.b16 %v1700, %v1698
  %v1719 = vpack.c.b16 %v1703, %v1701
  %v1720 = vpack.c.b16 %v1704, %v1702
  %1737 = vmatprep.subr.bf16.mxu0 %v1706
  %1738 = vmatpush1.bf16.msra.mxu0 %v1705
  %1739 = vmatprep.subr.bf16.mxu0 %v1708
  %1740 = vmatpush1.bf16.msra.mxu0 %v1707
  %1741 = vmatprep.subr.bf16.mxu0 %v1710
  %1742 = vmatpush1.bf16.msra.mxu0 %v1709
  %1743 = vmatprep.subr.bf16.mxu0 %v1712
  %1744 = vmatpush1.bf16.msra.mxu0 %v1711
  %1745 = vmatprep.subr.bf16.mxu0 %v1714
  %1746 = vmatpush1.bf16.msra.mxu0 %v1713
  %1747 = vmatprep.subr.bf16.mxu0 %v1716
  %1748 = vmatpush1.bf16.msra.mxu0 %v1715
  %1749 = vmatprep.subr.bf16.mxu0 %v1718
  %1750 = vmatpush1.bf16.msra.mxu0 %v1717
  %1751 = vmatprep.subr.bf16.mxu0 %v1720
  %1752 = vmatpush1.bf16.msra.mxu0 %v1719
  %1753 = vmatprep.subr.bf16.mxu0 0
  %1754 = vmatpush1.bf16.msra.mxu0 0
  %1755 = vmatprep.subr.bf16.mxu0 0
  %1756 = vmatpush1.bf16.msra.mxu0 0
  %1757 = vmatprep.subr.bf16.mxu0 0
  %1758 = vmatpush1.bf16.msra.mxu0 0
  %1759 = vmatprep.subr.bf16.mxu0 0
  %1760 = vmatpush1.bf16.msra.mxu0 0
  %1761 = vmatprep.subr.bf16.mxu0 0
  %1762 = vmatpush1.bf16.msra.mxu0 0
  %1763 = vmatprep.subr.bf16.mxu0 0
  %1764 = vmatpush1.bf16.msra.mxu0 0
  %1765 = vmatprep.subr.bf16.mxu0 0
  %1766 = vmatpush1.bf16.msra.mxu0 0
  %1767 = vmatprep.subr.bf16.mxu0 0
  %1768 = vmatpush1.bf16.msra.mxu0 0
  %1769 = vmatprep.mubr.bf16.mxu0 0
  %1770 = vmatmul.mubr.bf16.gmra.mrb[0].mxu0 %v1645
  %v1771 = vpop.f32.mrb[0].mxu0
  %v1772 = vadd.f32 %v1650, %v1771
  %v1773 = vpop.f32.mrb[0].mxu0
  %v1774 = vadd.f32 %v1654, %v1773
  %v1775 = vpop.f32.mrb[0].mxu0
  %v1776 = vpop.f32.mrb[0].mxu0
  %1777 = vdwg.mxu0
  %v1778 = vmul.f32 %v1772, 0.2
  %v1779 = vmul.f32 %v1774, 0.2
  %v1780 = vmax.f32 %v1772, %v1778
  %v1781 = vmax.f32 %v1774, %v1779
  %v1782 = vld [vmem:[%s1 + $0xba0] sm:$0xff]
  %v1783 = vld [vmem:[%s1 + $0xba8] sm:$0xff]
  %v1784 = vld [vmem:[%s1 + $0xbb0] sm:$0xff]
  %v1785 = vld [vmem:[%s1 + $0xbb8] sm:$0xff]
  %v1786 = vld [vmem:[%s1 + $0xbc0] sm:$0xff]
  %v1787 = vld [vmem:[%s1 + $0xbc8] sm:$0xff]
  %v1788 = vld [vmem:[%s1 + $0xbd0] sm:$0xff]
  %v1789 = vld [vmem:[%s1 + $0xbd8] sm:$0xff]
  %v1790 = vld [vmem:[%s1 + $0xbe0] sm:$0xff]
  %v1791 = vld [vmem:[%s1 + $0xbe8] sm:$0xff]
  %v1792 = vld [vmem:[%s1 + $0xbf0] sm:$0xff]
  %v1793 = vld [vmem:[%s1 + $0xbf8] sm:$0xff]
  %v1794 = vld [vmem:[%s1 + $0xc00] sm:$0xff]
  %v1795 = vld [vmem:[%s1 + $0xc08] sm:$0xff]
  %v1796 = vld [vmem:[%s1 + $0xc10] sm:$0xff]
  %v1797 = vld [vmem:[%s1 + $0xc18] sm:$0xff]
  %v1798 = vld [vmem:[%s1 + $0xc20] sm:$0xff]
  %v1799 = vld [vmem:[%s1 + $0xc28] sm:$0xff]
  %v1800 = vld [vmem:[%s1 + $0xc30] sm:$0xff]
  %v1801 = vld [vmem:[%s1 + $0xc38] sm:$0xff]
  %v1802 = vld [vmem:[%s1 + $0xc40] sm:$0xff]
  %v1803 = vld [vmem:[%s1 + $0xc48] sm:$0xff]
  %v1804 = vld [vmem:[%s1 + $0xc50] sm:$0xff]
  %v1805 = vld [vmem:[%s1 + $0xc58] sm:$0xff]
  %v1806 = vld [vmem:[%s1 + $0xc60] sm:$0xff]
  %v1807 = vld [vmem:[%s1 + $0xc68] sm:$0xff]
  %v1808 = vld [vmem:[%s1 + $0xc70] sm:$0xff]
  %v1809 = vld [vmem:[%s1 + $0xc78] sm:$0xff]
  %v1810 = vld [vmem:[%s1 + $0xc80] sm:$0xff]
  %v1811 = vld [vmem:[%s1 + $0xc88] sm:$0xff]
  %v1812 = vld [vmem:[%s1 + $0xc90] sm:$0xff]
  %v1813 = vld [vmem:[%s1 + $0xc98] sm:$0xff]
  %v1814 = vld [vmem:[%s1 + $0xca0] sm:$0xff]
  %v1815 = vld [vmem:[%s1 + $0xca8] sm:$0xff]
  %v1816 = vld [vmem:[%s1 + $0xcb0] sm:$0xff]
  %v1817 = vld [vmem:[%s1 + $0xcb8] sm:$0xff]
  %v1818 = vld [vmem:[%s1 + $0xcc0] sm:$0xff]
  %v1819 = vld [vmem:[%s1 + $0xcc8] sm:$0xff]
  %v1820 = vld [vmem:[%s1 + $0xcd0] sm:$0xff]
  %v1821 = vld [vmem:[%s1 + $0xcd8] sm:$0xff]
  %v1822 = vld [vmem:[%s1 + $0xce0] sm:$0xff]
  %v1823 = vld [vmem:[%s1 + $0xce8] sm:$0xff]
  %v1824 = vld [vmem:[%s1 + $0xcf0] sm:$0xff]
  %v1825 = vld [vmem:[%s1 + $0xcf8] sm:$0xff]
  %v1826 = vld [vmem:[%s1 + $0xd00] sm:$0xff]
  %v1827 = vld [vmem:[%s1 + $0xd08] sm:$0xff]
  %v1828 = vld [vmem:[%s1 + $0xd10] sm:$0xff]
  %v1829 = vld [vmem:[%s1 + $0xd18] sm:$0xff]
  %v1830 = vld [vmem:[%s1 + $0xd20] sm:$0xff]
  %v1831 = vld [vmem:[%s1 + $0xd28] sm:$0xff]
  %v1832 = vld [vmem:[%s1 + $0xd30] sm:$0xff]
  %v1833 = vld [vmem:[%s1 + $0xd38] sm:$0xff]
  %v1834 = vld [vmem:[%s1 + $0xd40] sm:$0xff]
  %v1835 = vld [vmem:[%s1 + $0xd48] sm:$0xff]
  %v1836 = vld [vmem:[%s1 + $0xd50] sm:$0xff]
  %v1837 = vld [vmem:[%s1 + $0xd58] sm:$0xff]
  %v1838 = vld [vmem:[%s1 + $0xd60] sm:$0xff]
  %v1839 = vld [vmem:[%s1 + $0xd68] sm:$0xff]
  %v1840 = vld [vmem:[%s1 + $0xd70] sm:$0xff]
  %v1841 = vld [vmem:[%s1 + $0xd78] sm:$0xff]
  %v1842 = vld [vmem:[%s1 + $0xd80] sm:$0xff]
  %v1843 = vld [vmem:[%s1 + $0xd88] sm:$0xff]
  %v1844 = vld [vmem:[%s1 + $0xd90] sm:$0xff]
  %v1845 = vld [vmem:[%s1 + $0xd98] sm:$0xff]
  %s1846 = scalar_lea.vmem %s2, 34
  %v1847 = vld [vmem:[%s1846] ss:$8 sm:$0xf]
  %v1848 = vpack.c.bf16 %v1780, %v1780
  %v1849 = vpack.c.bf16 %v1781, %v1781
  %v1851 = vlaneseq
  %v1852 = vshrl.u32 %v1851, 7
  %v1853 = vsub.s32 0, %v1852
  %v1854 = vrot.slane %v1847, %v1853
  %v1855 = vlaneseq
  %v1856 = vshrl.u32 %v1855, 7
  %v1857 = vsub.s32 1, %v1856
  %v1858 = vrot.slane %v1847, %v1857
  %v1859 = vlaneseq
  %v1860 = vshrl.u32 %v1859, 7
  %v1861 = vsub.s32 2, %v1860
  %v1862 = vrot.slane %v1847, %v1861
  %v1863 = vlaneseq
  %v1864 = vshrl.u32 %v1863, 7
  %v1865 = vsub.s32 3, %v1864
  %v1866 = vrot.slane %v1847, %v1865
  %v1935 = vunpack.c.l.b16 %v1782
  %v1936 = vunpack.c.h.b16 %v1782
  %v1937 = vunpack.c.l.b16 %v1783
  %v1938 = vunpack.c.h.b16 %v1783
  %v1939 = vunpack.c.l.b16 %v1784
  %v1940 = vunpack.c.h.b16 %v1784
  %v1941 = vunpack.c.l.b16 %v1785
  %v1942 = vunpack.c.h.b16 %v1785
  %v1943 = vunpack.c.l.b16 %v1786
  %v1944 = vunpack.c.h.b16 %v1786
  %v1945 = vunpack.c.l.b16 %v1787
  %v1946 = vunpack.c.h.b16 %v1787
  %v1947 = vunpack.c.l.b16 %v1788
  %v1948 = vunpack.c.h.b16 %v1788
  %v1949 = vunpack.c.l.b16 %v1789
  %v1950 = vunpack.c.h.b16 %v1789
  %v1951 = vunpack.c.l.b16 %v1790
  %v1952 = vunpack.c.h.b16 %v1790
  %v1953 = vunpack.c.l.b16 %v1791
  %v1954 = vunpack.c.h.b16 %v1791
  %v1955 = vunpack.c.l.b16 %v1792
  %v1956 = vunpack.c.h.b16 %v1792
  %v1957 = vunpack.c.l.b16 %v1793
  %v1958 = vunpack.c.h.b16 %v1793
  %v1959 = vunpack.c.l.b16 %v1794
  %v1960 = vunpack.c.h.b16 %v1794
  %v1961 = vunpack.c.l.b16 %v1795
  %v1962 = vunpack.c.h.b16 %v1795
  %v1963 = vunpack.c.l.b16 %v1796
  %v1964 = vunpack.c.h.b16 %v1796
  %v1965 = vunpack.c.l.b16 %v1797
  %v1966 = vunpack.c.h.b16 %v1797
  %v1967 = vunpack.c.l.b16 %v1798
  %v1968 = vunpack.c.h.b16 %v1798
  %v1969 = vunpack.c.l.b16 %v1799
  %v1970 = vunpack.c.h.b16 %v1799
  %v1971 = vunpack.c.l.b16 %v1800
  %v1972 = vunpack.c.h.b16 %v1800
  %v1973 = vunpack.c.l.b16 %v1801
  %v1974 = vunpack.c.h.b16 %v1801
  %v1975 = vunpack.c.l.b16 %v1802
  %v1976 = vunpack.c.h.b16 %v1802
  %v1977 = vunpack.c.l.b16 %v1803
  %v1978 = vunpack.c.h.b16 %v1803
  %v1979 = vunpack.c.l.b16 %v1804
  %v1980 = vunpack.c.h.b16 %v1804
  %v1981 = vunpack.c.l.b16 %v1805
  %v1982 = vunpack.c.h.b16 %v1805
  %v1983 = vunpack.c.l.b16 %v1806
  %v1984 = vunpack.c.h.b16 %v1806
  %v1985 = vunpack.c.l.b16 %v1807
  %v1986 = vunpack.c.h.b16 %v1807
  %v1987 = vunpack.c.l.b16 %v1808
  %v1988 = vunpack.c.h.b16 %v1808
  %v1989 = vunpack.c.l.b16 %v1809
  %v1990 = vunpack.c.h.b16 %v1809
  %v1991 = vunpack.c.l.b16 %v1810
  %v1992 = vunpack.c.h.b16 %v1810
  %v1993 = vunpack.c.l.b16 %v1811
  %v1994 = vunpack.c.h.b16 %v1811
  %v1995 = vunpack.c.l.b16 %v1812
  %v1996 = vunpack.c.h.b16 %v1812
  %v1997 = vunpack.c.l.b16 %v1813
  %v1998 = vunpack.c.h.b16 %v1813
  %v1999 = vunpack.c.l.b16 %v1814
  %v2000 = vunpack.c.h.b16 %v1814
  %v2001 = vunpack.c.l.b16 %v1815
  %v2002 = vunpack.c.h.b16 %v1815
  %v2003 = vunpack.c.l.b16 %v1816
  %v2004 = vunpack.c.h.b16 %v1816
  %v2005 = vunpack.c.l.b16 %v1817
  %v2006 = vunpack.c.h.b16 %v1817
  %v2007 = vunpack.c.l.b16 %v1818
  %v2008 = vunpack.c.h.b16 %v1818
  %v2009 = vunpack.c.l.b16 %v1819
  %v2010 = vunpack.c.h.b16 %v1819
  %v2011 = vunpack.c.l.b16 %v1820
  %v2012 = vunpack.c.h.b16 %v1820
  %v2013 = vunpack.c.l.b16 %v1821
  %v2014 = vunpack.c.h.b16 %v1821
  %v2015 = vunpack.c.l.b16 %v1822
  %v2016 = vunpack.c.h.b16 %v1822
  %v2017 = vunpack.c.l.b16 %v1823
  %v2018 = vunpack.c.h.b16 %v1823
  %v2019 = vunpack.c.l.b16 %v1824
  %v2020 = vunpack.c.h.b16 %v1824
  %v2021 = vunpack.c.l.b16 %v1825
  %v2022 = vunpack.c.h.b16 %v1825
  %v2023 = vunpack.c.l.b16 %v1826
  %v2024 = vunpack.c.h.b16 %v1826
  %v2025 = vunpack.c.l.b16 %v1827
  %v2026 = vunpack.c.h.b16 %v1827
  %v2027 = vunpack.c.l.b16 %v1828
  %v2028 = vunpack.c.h.b16 %v1828
  %v2029 = vunpack.c.l.b16 %v1829
  %v2030 = vunpack.c.h.b16 %v1829
  %v2031 = vunpack.c.l.b16 %v1830
  %v2032 = vunpack.c.h.b16 %v1830
  %v2033 = vunpack.c.l.b16 %v1831
  %v2034 = vunpack.c.h.b16 %v1831
  %v2035 = vunpack.c.l.b16 %v1832
  %v2036 = vunpack.c.h.b16 %v1832
  %v2037 = vunpack.c.l.b16 %v1833
  %v2038 = vunpack.c.h.b16 %v1833
  %v2039 = vunpack.c.l.b16 %v1834
  %v2040 = vunpack.c.h.b16 %v1834
  %v2041 = vunpack.c.l.b16 %v1835
  %v2042 = vunpack.c.h.b16 %v1835
  %v2043 = vunpack.c.l.b16 %v1836
  %v2044 = vunpack.c.h.b16 %v1836
  %v2045 = vunpack.c.l.b16 %v1837
  %v2046 = vunpack.c.h.b16 %v1837
  %v2047 = vunpack.c.l.b16 %v1838
  %v2048 = vunpack.c.h.b16 %v1838
  %v2049 = vunpack.c.l.b16 %v1839
  %v2050 = vunpack.c.h.b16 %v1839
  %v2051 = vunpack.c.l.b16 %v1840
  %v2052 = vunpack.c.h.b16 %v1840
  %v2053 = vunpack.c.l.b16 %v1841
  %v2054 = vunpack.c.h.b16 %v1841
  %v2055 = vunpack.c.l.b16 %v1842
  %v2056 = vunpack.c.h.b16 %v1842
  %v2057 = vunpack.c.l.b16 %v1843
  %v2058 = vunpack.c.h.b16 %v1843
  %v2059 = vunpack.c.l.b16 %v1844
  %v2060 = vunpack.c.h.b16 %v1844
  %v2061 = vunpack.c.l.b16 %v1845
  %v2062 = vunpack.c.h.b16 %v1845
  %v2063 = vpack.c.b16 %v1939, %v1935
  %v2064 = vpack.c.b16 %v1940, %v1936
  %v2065 = vpack.c.b16 %v1941, %v1937
  %v2066 = vpack.c.b16 %v1942, %v1938
  %v2067 = vpack.c.b16 %v1947, %v1943
  %v2068 = vpack.c.b16 %v1948, %v1944
  %v2069 = vpack.c.b16 %v1949, %v1945
  %v2070 = vpack.c.b16 %v1950, %v1946
  %v2071 = vpack.c.b16 %v1955, %v1951
  %v2072 = vpack.c.b16 %v1956, %v1952
  %v2073 = vpack.c.b16 %v1957, %v1953
  %v2074 = vpack.c.b16 %v1958, %v1954
  %v2075 = vpack.c.b16 %v1963, %v1959
  %v2076 = vpack.c.b16 %v1964, %v1960
  %v2077 = vpack.c.b16 %v1965, %v1961
  %v2078 = vpack.c.b16 %v1966, %v1962
  %v2079 = vpack.c.b16 %v1971, %v1967
  %v2080 = vpack.c.b16 %v1972, %v1968
  %v2081 = vpack.c.b16 %v1973, %v1969
  %v2082 = vpack.c.b16 %v1974, %v1970
  %v2083 = vpack.c.b16 %v1979, %v1975
  %v2084 = vpack.c.b16 %v1980, %v1976
  %v2085 = vpack.c.b16 %v1981, %v1977
  %v2086 = vpack.c.b16 %v1982, %v1978
  %v2087 = vpack.c.b16 %v1987, %v1983
  %v2088 = vpack.c.b16 %v1988, %v1984
  %v2089 = vpack.c.b16 %v1989, %v1985
  %v2090 = vpack.c.b16 %v1990, %v1986
  %v2091 = vpack.c.b16 %v1995, %v1991
  %v2092 = vpack.c.b16 %v1996, %v1992
  %v2093 = vpack.c.b16 %v1997, %v1993
  %v2094 = vpack.c.b16 %v1998, %v1994
  %v2095 = vpack.c.b16 %v2003, %v1999
  %v2096 = vpack.c.b16 %v2004, %v2000
  %v2097 = vpack.c.b16 %v2005, %v2001
  %v2098 = vpack.c.b16 %v2006, %v2002
  %v2099 = vpack.c.b16 %v2011, %v2007
  %v2100 = vpack.c.b16 %v2012, %v2008
  %v2101 = vpack.c.b16 %v2013, %v2009
  %v2102 = vpack.c.b16 %v2014, %v2010
  %v2103 = vpack.c.b16 %v2019, %v2015
  %v2104 = vpack.c.b16 %v2020, %v2016
  %v2105 = vpack.c.b16 %v2021, %v2017
  %v2106 = vpack.c.b16 %v2022, %v2018
  %v2107 = vpack.c.b16 %v2027, %v2023
  %v2108 = vpack.c.b16 %v2028, %v2024
  %v2109 = vpack.c.b16 %v2029, %v2025
  %v2110 = vpack.c.b16 %v2030, %v2026
  %v2111 = vpack.c.b16 %v2035, %v2031
  %v2112 = vpack.c.b16 %v2036, %v2032
  %v2113 = vpack.c.b16 %v2037, %v2033
  %v2114 = vpack.c.b16 %v2038, %v2034
  %v2115 = vpack.c.b16 %v2043, %v2039
  %v2116 = vpack.c.b16 %v2044, %v2040
  %v2117 = vpack.c.b16 %v2045, %v2041
  %v2118 = vpack.c.b16 %v2046, %v2042
  %v2119 = vpack.c.b16 %v2051, %v2047
  %v2120 = vpack.c.b16 %v2052, %v2048
  %v2121 = vpack.c.b16 %v2053, %v2049
  %v2122 = vpack.c.b16 %v2054, %v2050
  %v2123 = vpack.c.b16 %v2059, %v2055
  %v2124 = vpack.c.b16 %v2060, %v2056
  %v2125 = vpack.c.b16 %v2061, %v2057
  %v2126 = vpack.c.b16 %v2062, %v2058
  %2191 = vmatprep.subr.bf16.mxu0 %v2064
  %2192 = vmatpush1.bf16.msra.mxu0 %v2063
  %2193 = vmatprep.subr.bf16.mxu0 %v2068
  %2194 = vmatpush1.bf16.msra.mxu0 %v2067
  %2195 = vmatprep.subr.bf16.mxu0 %v2072
  %2196 = vmatpush1.bf16.msra.mxu0 %v2071
  %2197 = vmatprep.subr.bf16.mxu0 %v2076
  %2198 = vmatpush1.bf16.msra.mxu0 %v2075
  %2199 = vmatprep.subr.bf16.mxu0 %v2080
  %2200 = vmatpush1.bf16.msra.mxu0 %v2079
  %2201 = vmatprep.subr.bf16.mxu0 %v2084
  %2202 = vmatpush1.bf16.msra.mxu0 %v2083
  %2203 = vmatprep.subr.bf16.mxu0 %v2088
  %2204 = vmatpush1.bf16.msra.mxu0 %v2087
  %2205 = vmatprep.subr.bf16.mxu0 %v2092
  %2206 = vmatpush1.bf16.msra.mxu0 %v2091
  %2207 = vmatprep.subr.bf16.mxu0 %v2096
  %2208 = vmatpush1.bf16.msra.mxu0 %v2095
  %2209 = vmatprep.subr.bf16.mxu0 %v2100
  %2210 = vmatpush1.bf16.msra.mxu0 %v2099
  %2211 = vmatprep.subr.bf16.mxu0 %v2104
  %2212 = vmatpush1.bf16.msra.mxu0 %v2103
  %2213 = vmatprep.subr.bf16.mxu0 %v2108
  %2214 = vmatpush1.bf16.msra.mxu0 %v2107
  %2215 = vmatprep.subr.bf16.mxu0 %v2112
  %2216 = vmatpush1.bf16.msra.mxu0 %v2111
  %2217 = vmatprep.subr.bf16.mxu0 %v2116
  %2218 = vmatpush1.bf16.msra.mxu0 %v2115
  %2219 = vmatprep.subr.bf16.mxu0 %v2120
  %2220 = vmatpush1.bf16.msra.mxu0 %v2119
  %2221 = vmatprep.subr.bf16.mxu0 %v2124
  %2222 = vmatpush1.bf16.msra.mxu0 %v2123
  %2223 = vmatprep.mubr.bf16.mxu0 %v1849
  %2224 = vmatmul.mubr.bf16.gmra.mrb[0].mxu0 %v1848
  %v2225 = vpop.f32.mrb[0].mxu0
  %v2226 = vadd.f32 %v1854, %v2225
  %v2227 = vpop.f32.mrb[0].mxu0
  %v2228 = vadd.f32 %v1858, %v2227
  %v2229 = vpop.f32.mrb[0].mxu0
  %v2230 = vpop.f32.mrb[0].mxu0
  %2231 = vdwg.mxu0
  %2232 = vmatprep.subr.bf16.mxu0 %v2066
  %2233 = vmatpush1.bf16.msra.mxu0 %v2065
  %2234 = vmatprep.subr.bf16.mxu0 %v2070
  %2235 = vmatpush1.bf16.msra.mxu0 %v2069
  %2236 = vmatprep.subr.bf16.mxu0 %v2074
  %2237 = vmatpush1.bf16.msra.mxu0 %v2073
  %2238 = vmatprep.subr.bf16.mxu0 %v2078
  %2239 = vmatpush1.bf16.msra.mxu0 %v2077
  %2240 = vmatprep.subr.bf16.mxu0 %v2082
  %2241 = vmatpush1.bf16.msra.mxu0 %v2081
  %2242 = vmatprep.subr.bf16.mxu0 %v2086
  %2243 = vmatpush1.bf16.msra.mxu0 %v2085
  %2244 = vmatprep.subr.bf16.mxu0 %v2090
  %2245 = vmatpush1.bf16.msra.mxu0 %v2089
  %2246 = vmatprep.subr.bf16.mxu0 %v2094
  %2247 = vmatpush1.bf16.msra.mxu0 %v2093
  %2248 = vmatprep.subr.bf16.mxu0 %v2098
  %2249 = vmatpush1.bf16.msra.mxu0 %v2097
  %2250 = vmatprep.subr.bf16.mxu0 %v2102
  %2251 = vmatpush1.bf16.msra.mxu0 %v2101
  %2252 = vmatprep.subr.bf16.mxu0 %v2106
  %2253 = vmatpush1.bf16.msra.mxu0 %v2105
  %2254 = vmatprep.subr.bf16.mxu0 %v2110
  %2255 = vmatpush1.bf16.msra.mxu0 %v2109
  %2256 = vmatprep.subr.bf16.mxu0 %v2114
  %2257 = vmatpush1.bf16.msra.mxu0 %v2113
  %2258 = vmatprep.subr.bf16.mxu0 %v2118
  %2259 = vmatpush1.bf16.msra.mxu0 %v2117
  %2260 = vmatprep.subr.bf16.mxu0 %v2122
  %2261 = vmatpush1.bf16.msra.mxu0 %v2121
  %2262 = vmatprep.subr.bf16.mxu0 %v2126
  %2263 = vmatpush1.bf16.msra.mxu0 %v2125
  %2264 = vmatprep.mubr.bf16.mxu0 %v1849
  %2265 = vmatmul.mubr.bf16.gmra.mrb[0].mxu0 %v1848
  %v2266 = vpop.f32.mrb[0].mxu0
  %v2267 = vadd.f32 %v1862, %v2266
  %v2268 = vpop.f32.mrb[0].mxu0
  %v2269 = vadd.f32 %v1866, %v2268
  %v2270 = vpop.f32.mrb[0].mxu0
  %v2271 = vpop.f32.mrb[0].mxu0
  %2272 = vdwg.mxu0
  %v2273 = vmul.f32 %v2226, 0.2
  %v2274 = vmul.f32 %v2228, 0.2
  %v2275 = vmul.f32 %v2267, 0.2
  %v2276 = vmul.f32 %v2269, 0.2
  %v2277 = vmax.f32 %v2226, %v2273
  %v2278 = vmax.f32 %v2228, %v2274
  %v2279 = vmax.f32 %v2267, %v2275
  %v2280 = vmax.f32 %v2269, %v2276
  %v2281 = vld [vmem:[%s1 + $0xda0] sm:$0xff]
  %v2282 = vld [vmem:[%s1 + $0xdb0] sm:$0xff]
  %v2283 = vld [vmem:[%s1 + $0xdc0] sm:$0xff]
  %v2284 = vld [vmem:[%s1 + $0xdd0] sm:$0xff]
  %v2285 = vld [vmem:[%s1 + $0xde0] sm:$0xff]
  %v2286 = vld [vmem:[%s1 + $0xdf0] sm:$0xff]
  %v2287 = vld [vmem:[%s1 + $0xe00] sm:$0xff]
  %v2288 = vld [vmem:[%s1 + $0xe10] sm:$0xff]
  %v2289 = vld [vmem:[%s1 + $0xe20] sm:$0xff]
  %v2290 = vld [vmem:[%s1 + $0xe30] sm:$0xff]
  %v2291 = vld [vmem:[%s1 + $0xe40] sm:$0xff]
  %v2292 = vld [vmem:[%s1 + $0xe50] sm:$0xff]
  %v2293 = vld [vmem:[%s1 + $0xe60] sm:$0xff]
  %v2294 = vld [vmem:[%s1 + $0xe70] sm:$0xff]
  %v2295 = vld [vmem:[%s1 + $0xe80] sm:$0xff]
  %v2296 = vld [vmem:[%s1 + $0xe90] sm:$0xff]
  %v2297 = vld [vmem:[%s1 + $0xea0] sm:$0xff]
  %v2298 = vld [vmem:[%s1 + $0xeb0] sm:$0xff]
  %v2299 = vld [vmem:[%s1 + $0xec0] sm:$0xff]
  %v2300 = vld [vmem:[%s1 + $0xed0] sm:$0xff]
  %v2301 = vld [vmem:[%s1 + $0xee0] sm:$0xff]
  %v2302 = vld [vmem:[%s1 + $0xef0] sm:$0xff]
  %v2303 = vld [vmem:[%s1 + $0xf00] sm:$0xff]
  %v2304 = vld [vmem:[%s1 + $0xf10] sm:$0xff]
  %v2305 = vld [vmem:[%s1 + $0xf20] sm:$0xff]
  %v2306 = vld [vmem:[%s1 + $0xf30] sm:$0xff]
  %v2307 = vld [vmem:[%s1 + $0xf40] sm:$0xff]
  %v2308 = vld [vmem:[%s1 + $0xf50] sm:$0xff]
  %v2309 = vld [vmem:[%s1 + $0xf60] sm:$0xff]
  %v2310 = vld [vmem:[%s1 + $0xf70] sm:$0xff]
  %v2311 = vld [vmem:[%s1 + $0xf80] sm:$0xff]
  %v2312 = vld [vmem:[%s1 + $0xf90] sm:$0xff]
  %v2313 = vld [vmem:[%s1 + $0xfa0] sm:$0xff]
  %v2314 = vld [vmem:[%s1 + $0xfb0] sm:$0xff]
  %v2315 = vld [vmem:[%s1 + $0xfc0] sm:$0xff]
  %v2316 = vld [vmem:[%s1 + $0xfd0] sm:$0xff]
  %v2317 = vld [vmem:[%s1 + $0xfe0] sm:$0xff]
  %v2318 = vld [vmem:[%s1 + $0xff0] sm:$0xff]
  %v2319 = vld [vmem:[%s1 + $0x1000] sm:$0xff]
  %v2320 = vld [vmem:[%s1 + $0x1010] sm:$0xff]
  %v2321 = vld [vmem:[%s1 + $0x1020] sm:$0xff]
  %v2322 = vld [vmem:[%s1 + $0x1030] sm:$0xff]
  %v2323 = vld [vmem:[%s1 + $0x1040] sm:$0xff]
  %v2324 = vld [vmem:[%s1 + $0x1050] sm:$0xff]
  %v2325 = vld [vmem:[%s1 + $0x1060] sm:$0xff]
  %v2326 = vld [vmem:[%s1 + $0x1070] sm:$0xff]
  %v2327 = vld [vmem:[%s1 + $0x1080] sm:$0xff]
  %v2328 = vld [vmem:[%s1 + $0x1090] sm:$0xff]
  %v2329 = vld [vmem:[%s1 + $0x10a0] sm:$0xff]
  %v2330 = vld [vmem:[%s1 + $0x10b0] sm:$0xff]
  %v2331 = vld [vmem:[%s1 + $0x10c0] sm:$0xff]
  %v2332 = vld [vmem:[%s1 + $0x10d0] sm:$0xff]
  %v2333 = vld [vmem:[%s1 + $0x10e0] sm:$0xff]
  %v2334 = vld [vmem:[%s1 + $0x10f0] sm:$0xff]
  %v2335 = vld [vmem:[%s1 + $0x1100] sm:$0xff]
  %v2336 = vld [vmem:[%s1 + $0x1110] sm:$0xff]
  %v2337 = vld [vmem:[%s1 + $0x1120] sm:$0xff]
  %v2338 = vld [vmem:[%s1 + $0x1130] sm:$0xff]
  %v2339 = vld [vmem:[%s1 + $0x1140] sm:$0xff]
  %v2340 = vld [vmem:[%s1 + $0x1150] sm:$0xff]
  %v2341 = vld [vmem:[%s1 + $0x1160] sm:$0xff]
  %v2342 = vld [vmem:[%s1 + $0x1170] sm:$0xff]
  %v2343 = vld [vmem:[%s1 + $0x1180] sm:$0xff]
  %v2344 = vld [vmem:[%s1 + $0x1190] sm:$0xff]
  %s2345 = scalar_lea.vmem %s2, 35
  %v2346 = vld [vmem:[%s2345] ss:$8 sm:$0x3]
  %v2347 = vpack.c.bf16 %v2277, %v2277
  %v2348 = vpack.c.bf16 %v2278, %v2278
  %v2349 = vpack.c.bf16 %v2279, %v2279
  %v2350 = vpack.c.bf16 %v2280, %v2280
  %v2352 = vlaneseq
  %v2353 = vshrl.u32 %v2352, 7
  %v2354 = vsub.s32 0, %v2353
  %v2355 = vrot.slane %v2346, %v2354
  %v2356 = vlaneseq
  %v2357 = vshrl.u32 %v2356, 7
  %v2358 = vsub.s32 1, %v2357
  %v2359 = vrot.slane %v2346, %v2358
  %v2426 = vunpack.c.l.b16 %v2281
  %v2427 = vunpack.c.h.b16 %v2281
  %v2428 = vunpack.c.l.b16 %v2282
  %v2429 = vunpack.c.h.b16 %v2282
  %v2430 = vunpack.c.l.b16 %v2283
  %v2431 = vunpack.c.h.b16 %v2283
  %v2432 = vunpack.c.l.b16 %v2284
  %v2433 = vunpack.c.h.b16 %v2284
  %v2434 = vunpack.c.l.b16 %v2285
  %v2435 = vunpack.c.h.b16 %v2285
  %v2436 = vunpack.c.l.b16 %v2286
  %v2437 = vunpack.c.h.b16 %v2286
  %v2438 = vunpack.c.l.b16 %v2287
  %v2439 = vunpack.c.h.b16 %v2287
  %v2440 = vunpack.c.l.b16 %v2288
  %v2441 = vunpack.c.h.b16 %v2288
  %v2442 = vunpack.c.l.b16 %v2289
  %v2443 = vunpack.c.h.b16 %v2289
  %v2444 = vunpack.c.l.b16 %v2290
  %v2445 = vunpack.c.h.b16 %v2290
  %v2446 = vunpack.c.l.b16 %v2291
  %v2447 = vunpack.c.h.b16 %v2291
  %v2448 = vunpack.c.l.b16 %v2292
  %v2449 = vunpack.c.h.b16 %v2292
  %v2450 = vunpack.c.l.b16 %v2293
  %v2451 = vunpack.c.h.b16 %v2293
  %v2452 = vunpack.c.l.b16 %v2294
  %v2453 = vunpack.c.h.b16 %v2294
  %v2454 = vunpack.c.l.b16 %v2295
  %v2455 = vunpack.c.h.b16 %v2295
  %v2456 = vunpack.c.l.b16 %v2296
  %v2457 = vunpack.c.h.b16 %v2296
  %v2458 = vunpack.c.l.b16 %v2297
  %v2459 = vunpack.c.h.b16 %v2297
  %v2460 = vunpack.c.l.b16 %v2298
  %v2461 = vunpack.c.h.b16 %v2298
  %v2462 = vunpack.c.l.b16 %v2299
  %v2463 = vunpack.c.h.b16 %v2299
  %v2464 = vunpack.c.l.b16 %v2300
  %v2465 = vunpack.c.h.b16 %v2300
  %v2466 = vunpack.c.l.b16 %v2301
  %v2467 = vunpack.c.h.b16 %v2301
  %v2468 = vunpack.c.l.b16 %v2302
  %v2469 = vunpack.c.h.b16 %v2302
  %v2470 = vunpack.c.l.b16 %v2303
  %v2471 = vunpack.c.h.b16 %v2303
  %v2472 = vunpack.c.l.b16 %v2304
  %v2473 = vunpack.c.h.b16 %v2304
  %v2474 = vunpack.c.l.b16 %v2305
  %v2475 = vunpack.c.h.b16 %v2305
  %v2476 = vunpack.c.l.b16 %v2306
  %v2477 = vunpack.c.h.b16 %v2306
  %v2478 = vunpack.c.l.b16 %v2307
  %v2479 = vunpack.c.h.b16 %v2307
  %v2480 = vunpack.c.l.b16 %v2308
  %v2481 = vunpack.c.h.b16 %v2308
  %v2482 = vunpack.c.l.b16 %v2309
  %v2483 = vunpack.c.h.b16 %v2309
  %v2484 = vunpack.c.l.b16 %v2310
  %v2485 = vunpack.c.h.b16 %v2310
  %v2486 = vunpack.c.l.b16 %v2311
  %v2487 = vunpack.c.h.b16 %v2311
  %v2488 = vunpack.c.l.b16 %v2312
  %v2489 = vunpack.c.h.b16 %v2312
  %v2490 = vunpack.c.l.b16 %v2313
  %v2491 = vunpack.c.h.b16 %v2313
  %v2492 = vunpack.c.l.b16 %v2314
  %v2493 = vunpack.c.h.b16 %v2314
  %v2494 = vunpack.c.l.b16 %v2315
  %v2495 = vunpack.c.h.b16 %v2315
  %v2496 = vunpack.c.l.b16 %v2316
  %v2497 = vunpack.c.h.b16 %v2316
  %v2498 = vunpack.c.l.b16 %v2317
  %v2499 = vunpack.c.h.b16 %v2317
  %v2500 = vunpack.c.l.b16 %v2318
  %v2501 = vunpack.c.h.b16 %v2318
  %v2502 = vunpack.c.l.b16 %v2319
  %v2503 = vunpack.c.h.b16 %v2319
  %v2504 = vunpack.c.l.b16 %v2320
  %v2505 = vunpack.c.h.b16 %v2320
  %v2506 = vunpack.c.l.b16 %v2321
  %v2507 = vunpack.c.h.b16 %v2321
  %v2508 = vunpack.c.l.b16 %v2322
  %v2509 = vunpack.c.h.b16 %v2322
  %v2510 = vunpack.c.l.b16 %v2323
  %v2511 = vunpack.c.h.b16 %v2323
  %v2512 = vunpack.c.l.b16 %v2324
  %v2513 = vunpack.c.h.b16 %v2324
  %v2514 = vunpack.c.l.b16 %v2325
  %v2515 = vunpack.c.h.b16 %v2325
  %v2516 = vunpack.c.l.b16 %v2326
  %v2517 = vunpack.c.h.b16 %v2326
  %v2518 = vunpack.c.l.b16 %v2327
  %v2519 = vunpack.c.h.b16 %v2327
  %v2520 = vunpack.c.l.b16 %v2328
  %v2521 = vunpack.c.h.b16 %v2328
  %v2522 = vunpack.c.l.b16 %v2329
  %v2523 = vunpack.c.h.b16 %v2329
  %v2524 = vunpack.c.l.b16 %v2330
  %v2525 = vunpack.c.h.b16 %v2330
  %v2526 = vunpack.c.l.b16 %v2331
  %v2527 = vunpack.c.h.b16 %v2331
  %v2528 = vunpack.c.l.b16 %v2332
  %v2529 = vunpack.c.h.b16 %v2332
  %v2530 = vunpack.c.l.b16 %v2333
  %v2531 = vunpack.c.h.b16 %v2333
  %v2532 = vunpack.c.l.b16 %v2334
  %v2533 = vunpack.c.h.b16 %v2334
  %v2534 = vunpack.c.l.b16 %v2335
  %v2535 = vunpack.c.h.b16 %v2335
  %v2536 = vunpack.c.l.b16 %v2336
  %v2537 = vunpack.c.h.b16 %v2336
  %v2538 = vunpack.c.l.b16 %v2337
  %v2539 = vunpack.c.h.b16 %v2337
  %v2540 = vunpack.c.l.b16 %v2338
  %v2541 = vunpack.c.h.b16 %v2338
  %v2542 = vunpack.c.l.b16 %v2339
  %v2543 = vunpack.c.h.b16 %v2339
  %v2544 = vunpack.c.l.b16 %v2340
  %v2545 = vunpack.c.h.b16 %v2340
  %v2546 = vunpack.c.l.b16 %v2341
  %v2547 = vunpack.c.h.b16 %v2341
  %v2548 = vunpack.c.l.b16 %v2342
  %v2549 = vunpack.c.h.b16 %v2342
  %v2550 = vunpack.c.l.b16 %v2343
  %v2551 = vunpack.c.h.b16 %v2343
  %v2552 = vunpack.c.l.b16 %v2344
  %v2553 = vunpack.c.h.b16 %v2344
  %v2554 = vpack.c.b16 %v2428, %v2426
  %v2555 = vpack.c.b16 %v2429, %v2427
  %v2556 = vpack.c.b16 %v2432, %v2430
  %v2557 = vpack.c.b16 %v2433, %v2431
  %v2558 = vpack.c.b16 %v2436, %v2434
  %v2559 = vpack.c.b16 %v2437, %v2435
  %v2560 = vpack.c.b16 %v2440, %v2438
  %v2561 = vpack.c.b16 %v2441, %v2439
  %v2562 = vpack.c.b16 %v2444, %v2442
  %v2563 = vpack.c.b16 %v2445, %v2443
  %v2564 = vpack.c.b16 %v2448, %v2446
  %v2565 = vpack.c.b16 %v2449, %v2447
  %v2566 = vpack.c.b16 %v2452, %v2450
  %v2567 = vpack.c.b16 %v2453, %v2451
  %v2568 = vpack.c.b16 %v2456, %v2454
  %v2569 = vpack.c.b16 %v2457, %v2455
  %v2570 = vpack.c.b16 %v2460, %v2458
  %v2571 = vpack.c.b16 %v2461, %v2459
  %v2572 = vpack.c.b16 %v2464, %v2462
  %v2573 = vpack.c.b16 %v2465, %v2463
  %v2574 = vpack.c.b16 %v2468, %v2466
  %v2575 = vpack.c.b16 %v2469, %v2467
  %v2576 = vpack.c.b16 %v2472, %v2470
  %v2577 = vpack.c.b16 %v2473, %v2471
  %v2578 = vpack.c.b16 %v2476, %v2474
  %v2579 = vpack.c.b16 %v2477, %v2475
  %v2580 = vpack.c.b16 %v2480, %v2478
  %v2581 = vpack.c.b16 %v2481, %v2479
  %v2582 = vpack.c.b16 %v2484, %v2482
  %v2583 = vpack.c.b16 %v2485, %v2483
  %v2584 = vpack.c.b16 %v2488, %v2486
  %v2585 = vpack.c.b16 %v2489, %v2487
  %v2586 = vpack.c.b16 %v2492, %v2490
  %v2587 = vpack.c.b16 %v2493, %v2491
  %v2588 = vpack.c.b16 %v2496, %v2494
  %v2589 = vpack.c.b16 %v2497, %v2495
  %v2590 = vpack.c.b16 %v2500, %v2498
  %v2591 = vpack.c.b16 %v2501, %v2499
  %v2592 = vpack.c.b16 %v2504, %v2502
  %v2593 = vpack.c.b16 %v2505, %v2503
  %v2594 = vpack.c.b16 %v2508, %v2506
  %v2595 = vpack.c.b16 %v2509, %v2507
  %v2596 = vpack.c.b16 %v2512, %v2510
  %v2597 = vpack.c.b16 %v2513, %v2511
  %v2598 = vpack.c.b16 %v2516, %v2514
  %v2599 = vpack.c.b16 %v2517, %v2515
  %v2600 = vpack.c.b16 %v2520, %v2518
  %v2601 = vpack.c.b16 %v2521, %v2519
  %v2602 = vpack.c.b16 %v2524, %v2522
  %v2603 = vpack.c.b16 %v2525, %v2523
  %v2604 = vpack.c.b16 %v2528, %v2526
  %v2605 = vpack.c.b16 %v2529, %v2527
  %v2606 = vpack.c.b16 %v2532, %v2530
  %v2607 = vpack.c.b16 %v2533, %v2531
  %v2608 = vpack.c.b16 %v2536, %v2534
  %v2609 = vpack.c.b16 %v2537, %v2535
  %v2610 = vpack.c.b16 %v2540, %v2538
  %v2611 = vpack.c.b16 %v2541, %v2539
  %v2612 = vpack.c.b16 %v2544, %v2542
  %v2613 = vpack.c.b16 %v2545, %v2543
  %v2614 = vpack.c.b16 %v2548, %v2546
  %v2615 = vpack.c.b16 %v2549, %v2547
  %v2616 = vpack.c.b16 %v2552, %v2550
  %v2617 = vpack.c.b16 %v2553, %v2551
  %2682 = vmatprep.subr.bf16.mxu0 %v2555
  %2683 = vmatpush1.bf16.msra.mxu0 %v2554
  %2684 = vmatprep.subr.bf16.mxu0 %v2557
  %2685 = vmatpush1.bf16.msra.mxu0 %v2556
  %2686 = vmatprep.subr.bf16.mxu0 %v2559
  %2687 = vmatpush1.bf16.msra.mxu0 %v2558
  %2688 = vmatprep.subr.bf16.mxu0 %v2561
  %2689 = vmatpush1.bf16.msra.mxu0 %v2560
  %2690 = vmatprep.subr.bf16.mxu0 %v2563
  %2691 = vmatpush1.bf16.msra.mxu0 %v2562
  %2692 = vmatprep.subr.bf16.mxu0 %v2565
  %2693 = vmatpush1.bf16.msra.mxu0 %v2564
  %2694 = vmatprep.subr.bf16.mxu0 %v2567
  %2695 = vmatpush1.bf16.msra.mxu0 %v2566
  %2696 = vmatprep.subr.bf16.mxu0 %v2569
  %2697 = vmatpush1.bf16.msra.mxu0 %v2568
  %2698 = vmatprep.subr.bf16.mxu0 %v2571
  %2699 = vmatpush1.bf16.msra.mxu0 %v2570
  %2700 = vmatprep.subr.bf16.mxu0 %v2573
  %2701 = vmatpush1.bf16.msra.mxu0 %v2572
  %2702 = vmatprep.subr.bf16.mxu0 %v2575
  %2703 = vmatpush1.bf16.msra.mxu0 %v2574
  %2704 = vmatprep.subr.bf16.mxu0 %v2577
  %2705 = vmatpush1.bf16.msra.mxu0 %v2576
  %2706 = vmatprep.subr.bf16.mxu0 %v2579
  %2707 = vmatpush1.bf16.msra.mxu0 %v2578
  %2708 = vmatprep.subr.bf16.mxu0 %v2581
  %2709 = vmatpush1.bf16.msra.mxu0 %v2580
  %2710 = vmatprep.subr.bf16.mxu0 %v2583
  %2711 = vmatpush1.bf16.msra.mxu0 %v2582
  %2712 = vmatprep.subr.bf16.mxu0 %v2585
  %2713 = vmatpush1.bf16.msra.mxu0 %v2584
  %2714 = vmatprep.mubr.bf16.mxu0 %v2348
  %2715 = vmatmul.mubr.bf16.gmra.mrb[0].mxu0 %v2347
  %v2716 = vpop.f32.mrb[0].mxu0
  %v2717 = vadd.f32 %v2355, %v2716
  %v2718 = vpop.f32.mrb[0].mxu0
  %v2719 = vadd.f32 %v2359, %v2718
  %v2720 = vpop.f32.mrb[0].mxu0
  %v2721 = vpop.f32.mrb[0].mxu0
  %2722 = vdwg.mxu0
  %2723 = vmatprep.subr.bf16.mxu0 %v2587
  %2724 = vmatpush1.bf16.msra.mxu0 %v2586
  %2725 = vmatprep.subr.bf16.mxu0 %v2589
  %2726 = vmatpush1.bf16.msra.mxu0 %v2588
  %2727 = vmatprep.subr.bf16.mxu0 %v2591
  %2728 = vmatpush1.bf16.msra.mxu0 %v2590
  %2729 = vmatprep.subr.bf16.mxu0 %v2593
  %2730 = vmatpush1.bf16.msra.mxu0 %v2592
  %2731 = vmatprep.subr.bf16.mxu0 %v2595
  %2732 = vmatpush1.bf16.msra.mxu0 %v2594
  %2733 = vmatprep.subr.bf16.mxu0 %v2597
  %2734 = vmatpush1.bf16.msra.mxu0 %v2596
  %2735 = vmatprep.subr.bf16.mxu0 %v2599
  %2736 = vmatpush1.bf16.msra.mxu0 %v2598
  %2737 = vmatprep.subr.bf16.mxu0 %v2601
  %2738 = vmatpush1.bf16.msra.mxu0 %v2600
  %2739 = vmatprep.subr.bf16.mxu0 %v2603
  %2740 = vmatpush1.bf16.msra.mxu0 %v2602
  %2741 = vmatprep.subr.bf16.mxu0 %v2605
  %2742 = vmatpush1.bf16.msra.mxu0 %v2604
  %2743 = vmatprep.subr.bf16.mxu0 %v2607
  %2744 = vmatpush1.bf16.msra.mxu0 %v2606
  %2745 = vmatprep.subr.bf16.mxu0 %v2609
  %2746 = vmatpush1.bf16.msra.mxu0 %v2608
  %2747 = vmatprep.subr.bf16.mxu0 %v2611
  %2748 = vmatpush1.bf16.msra.mxu0 %v2610
  %2749 = vmatprep.subr.bf16.mxu0 %v2613
  %2750 = vmatpush1.bf16.msra.mxu0 %v2612
  %2751 = vmatprep.subr.bf16.mxu0 %v2615
  %2752 = vmatpush1.bf16.msra.mxu0 %v2614
  %2753 = vmatprep.subr.bf16.mxu0 %v2617
  %2754 = vmatpush1.bf16.msra.mxu0 %v2616
  %2755 = vmatprep.mubr.bf16.mxu0 %v2350
  %2756 = vmatmul.mubr.bf16.gmra.mrb[0].mxu0 %v2349
  %v2757 = vpop.f32.mrb[0].mxu0
  %v2758 = vadd.f32 %v2717, %v2757
  %v2759 = vpop.f32.mrb[0].mxu0
  %v2760 = vadd.f32 %v2719, %v2759
  %v2761 = vpop.f32.mrb[0].mxu0
  %v2762 = vpop.f32.mrb[0].mxu0
  %2763 = vdwg.mxu0
  %2764 = vst [vmem:[%s3] sm:$0xff] %v2758
  %2765 = vst [vmem:[%s3 + $0x8] sm:$0xff] %v2760
  %v2766 = vld [vmem:[%s1 + $0x11a0] sm:$0xff]
  %v2767 = vld [vmem:[%s1 + $0x11b0] sm:$0xff]
  %s2768 = scalar_lea.vmem %s2, 36
  %v2769 = vld [vmem:[%s2768] ss:$8 sm:$0x3]
  %v2771 = vlaneseq
  %v2772 = vshrl.u32 %v2771, 7
  %v2773 = vsub.s32 0, %v2772
  %v2774 = vrot.slane %v2769, %v2773
  %v2775 = vlaneseq
  %v2776 = vshrl.u32 %v2775, 7
  %v2777 = vsub.s32 1, %v2776
  %v2778 = vrot.slane %v2769, %v2777
  %v2783 = vunpack.c.l.b16 %v2766
  %v2784 = vunpack.c.h.b16 %v2766
  %v2785 = vunpack.c.l.b16 %v2767
  %v2786 = vunpack.c.h.b16 %v2767
  %v2787 = vpack.c.b16 %v2785, %v2783
  %v2788 = vpack.c.b16 %v2786, %v2784
  %2791 = vmatprep.subr.bf16.mxu0 %v2788
  %2792 = vmatpush1.bf16.msra.mxu0 %v2787
  %2793 = vmatprep.subr.bf16.mxu0 0
  %2794 = vmatpush1.bf16.msra.mxu0 0
  %2795 = vmatprep.subr.bf16.mxu0 0
  %2796 = vmatpush1.bf16.msra.mxu0 0
  %2797 = vmatprep.subr.bf16.mxu0 0
  %2798 = vmatpush1.bf16.msra.mxu0 0
  %2799 = vmatprep.subr.bf16.mxu0 0
  %2800 = vmatpush1.bf16.msra.mxu0 0
  %2801 = vmatprep.subr.bf16.mxu0 0
  %2802 = vmatpush1.bf16.msra.mxu0 0
  %2803 = vmatprep.subr.bf16.mxu0 0
  %2804 = vmatpush1.bf16.msra.mxu0 0
  %2805 = vmatprep.subr.bf16.mxu0 0
  %2806 = vmatpush1.bf16.msra.mxu0 0
  %2807 = vmatprep.subr.bf16.mxu0 0
  %2808 = vmatpush1.bf16.msra.mxu0 0
  %2809 = vmatprep.subr.bf16.mxu0 0
  %2810 = vmatpush1.bf16.msra.mxu0 0
  %2811 = vmatprep.subr.bf16.mxu0 0
  %2812 = vmatpush1.bf16.msra.mxu0 0
  %2813 = vmatprep.subr.bf16.mxu0 0
  %2814 = vmatpush1.bf16.msra.mxu0 0
  %2815 = vmatprep.subr.bf16.mxu0 0
  %2816 = vmatpush1.bf16.msra.mxu0 0
  %2817 = vmatprep.subr.bf16.mxu0 0
  %2818 = vmatpush1.bf16.msra.mxu0 0
  %2819 = vmatprep.subr.bf16.mxu0 0
  %2820 = vmatpush1.bf16.msra.mxu0 0
  %2821 = vmatprep.subr.bf16.mxu0 0
  %2822 = vmatpush1.bf16.msra.mxu0 0
  %2823 = vmatprep.mubr.bf16.mxu0 0
  %2824 = vmatmul.mubr.bf16.gmra.mrb[0].mxu0 %v1441
  %v2825 = vpop.f32.mrb[0].mxu0
  %v2826 = vadd.f32 %v2774, %v2825
  %v2827 = vpop.f32.mrb[0].mxu0
  %v2828 = vadd.f32 %v2778, %v2827
  %v2829 = vpop.f32.mrb[0].mxu0
  %v2830 = vpop.f32.mrb[0].mxu0
  %2831 = vdwg.mxu0
  %v2832 = vmul.f32 %v2826, 0.2
  %v2833 = vmul.f32 %v2828, 0.2
  %v2834 = vmax.f32 %v2826, %v2832
  %v2835 = vmax.f32 %v2828, %v2833
  %v2836 = vld [vmem:[%s1 + $0x11c0] sm:$0xf]
  %v2837 = vld [vmem:[%s1 + $0x11d0] sm:$0xf]
  %v2838 = vld [vmem:[%s1 + $0x11e0] sm:$0xf]
  %v2839 = vld [vmem:[%s1 + $0x11f0] sm:$0xf]
  %v2840 = vld [vmem:[%s1 + $0x1200] sm:$0xf]
  %v2841 = vld [vmem:[%s1 + $0x1210] sm:$0xf]
  %v2842 = vld [vmem:[%s1 + $0x1220] sm:$0xf]
  %v2843 = vld [vmem:[%s1 + $0x1230] sm:$0xf]
  %v2844 = vld [vmem:[%s1 + $0x1240] sm:$0xf]
  %v2845 = vld [vmem:[%s1 + $0x1250] sm:$0xf]
  %v2846 = vld [vmem:[%s1 + $0x1260] sm:$0xf]
  %v2847 = vld [vmem:[%s1 + $0x1270] sm:$0xf]
  %v2848 = vld [vmem:[%s1 + $0x1280] sm:$0xf]
  %v2849 = vld [vmem:[%s1 + $0x1290] sm:$0xf]
  %v2850 = vld [vmem:[%s1 + $0x12a0] sm:$0xf]
  %v2851 = vld [vmem:[%s1 + $0x12b0] sm:$0xf]
  %v2852 = vld [vmem:[%s1 + $0x12c0] sm:$0xf]
  %v2853 = vld [vmem:[%s1 + $0x12d0] sm:$0xf]
  %v2854 = vld [vmem:[%s1 + $0x12e0] sm:$0xf]
  %v2855 = vld [vmem:[%s1 + $0x12f0] sm:$0xf]
  %v2856 = vld [vmem:[%s1 + $0x1300] sm:$0xf]
  %v2857 = vld [vmem:[%s1 + $0x1310] sm:$0xf]
  %v2858 = vld [vmem:[%s1 + $0x1320] sm:$0xf]
  %v2859 = vld [vmem:[%s1 + $0x1330] sm:$0xf]
  %v2860 = vld [vmem:[%s1 + $0x1340] sm:$0xf]
  %v2861 = vld [vmem:[%s1 + $0x1350] sm:$0xf]
  %v2862 = vld [vmem:[%s1 + $0x1360] sm:$0xf]
  %v2863 = vld [vmem:[%s1 + $0x1370] sm:$0xf]
  %v2864 = vld [vmem:[%s1 + $0x1380] sm:$0xf]
  %v2865 = vld [vmem:[%s1 + $0x1390] sm:$0xf]
  %v2866 = vld [vmem:[%s1 + $0x13a0] sm:$0xf]
  %v2867 = vld [vmem:[%s1 + $0x13b0] sm:$0xf]
  %v2868 = vld [vmem:[%s2 + $0x25] ss:$0 sm:$0xff]
  %v2869 = vpack.c.bf16 %v2834, %v2834
  %v2870 = vpack.c.bf16 %v2835, %v2835
  %v2903 = vunpack.c.l.b16 %v2836
  %v2904 = vunpack.c.l.b16 %v2837
  %v2905 = vunpack.c.l.b16 %v2838
  %v2906 = vunpack.c.l.b16 %v2839
  %v2907 = vunpack.c.l.b16 %v2840
  %v2908 = vunpack.c.l.b16 %v2841
  %v2909 = vunpack.c.l.b16 %v2842
  %v2910 = vunpack.c.l.b16 %v2843
  %v2911 = vunpack.c.l.b16 %v2844
  %v2912 = vunpack.c.l.b16 %v2845
  %v2913 = vunpack.c.l.b16 %v2846
  %v2914 = vunpack.c.l.b16 %v2847
  %v2915 = vunpack.c.l.b16 %v2848
  %v2916 = vunpack.c.l.b16 %v2849
  %v2917 = vunpack.c.l.b16 %v2850
  %v2918 = vunpack.c.l.b16 %v2851
  %v2919 = vunpack.c.l.b16 %v2852
  %v2920 = vunpack.c.l.b16 %v2853
  %v2921 = vunpack.c.l.b16 %v2854
  %v2922 = vunpack.c.l.b16 %v2855
  %v2923 = vunpack.c.l.b16 %v2856
  %v2924 = vunpack.c.l.b16 %v2857
  %v2925 = vunpack.c.l.b16 %v2858
  %v2926 = vunpack.c.l.b16 %v2859
  %v2927 = vunpack.c.l.b16 %v2860
  %v2928 = vunpack.c.l.b16 %v2861
  %v2929 = vunpack.c.l.b16 %v2862
  %v2930 = vunpack.c.l.b16 %v2863
  %v2931 = vunpack.c.l.b16 %v2864
  %v2932 = vunpack.c.l.b16 %v2865
  %v2933 = vunpack.c.l.b16 %v2866
  %v2934 = vunpack.c.l.b16 %v2867
  %v2935 = vpack.c.b16 %v2904, %v2903
  %v2936 = vpack.c.b16 %v2906, %v2905
  %v2937 = vpack.c.b16 %v2908, %v2907
  %v2938 = vpack.c.b16 %v2910, %v2909
  %v2939 = vpack.c.b16 %v2912, %v2911
  %v2940 = vpack.c.b16 %v2914, %v2913
  %v2941 = vpack.c.b16 %v2916, %v2915
  %v2942 = vpack.c.b16 %v2918, %v2917
  %v2943 = vpack.c.b16 %v2920, %v2919
  %v2944 = vpack.c.b16 %v2922, %v2921
  %v2945 = vpack.c.b16 %v2924, %v2923
  %v2946 = vpack.c.b16 %v2926, %v2925
  %v2947 = vpack.c.b16 %v2928, %v2927
  %v2948 = vpack.c.b16 %v2930, %v2929
  %v2949 = vpack.c.b16 %v2932, %v2931
  %v2950 = vpack.c.b16 %v2934, %v2933
  %2967 = vmatprep.subr.bf16.mxu0 0
  %2968 = vmatpush1.bf16.msra.mxu0 %v2935
  %2969 = vmatprep.subr.bf16.mxu0 0
  %2970 = vmatpush1.bf16.msra.mxu0 %v2936
  %2971 = vmatprep.subr.bf16.mxu0 0
  %2972 = vmatpush1.bf16.msra.mxu0 %v2937
  %2973 = vmatprep.subr.bf16.mxu0 0
  %2974 = vmatpush1.bf16.msra.mxu0 %v2938
  %2975 = vmatprep.subr.bf16.mxu0 0
  %2976 = vmatpush1.bf16.msra.mxu0 %v2939
  %2977 = vmatprep.subr.bf16.mxu0 0
  %2978 = vmatpush1.bf16.msra.mxu0 %v2940
  %2979 = vmatprep.subr.bf16.mxu0 0
  %2980 = vmatpush1.bf16.msra.mxu0 %v2941
  %2981 = vmatprep.subr.bf16.mxu0 0
  %2982 = vmatpush1.bf16.msra.mxu0 %v2942
  %2983 = vmatprep.subr.bf16.mxu0 0
  %2984 = vmatpush1.bf16.msra.mxu0 %v2943
  %2985 = vmatprep.subr.bf16.mxu0 0
  %2986 = vmatpush1.bf16.msra.mxu0 %v2944
  %2987 = vmatprep.subr.bf16.mxu0 0
  %2988 = vmatpush1.bf16.msra.mxu0 %v2945
  %2989 = vmatprep.subr.bf16.mxu0 0
  %2990 = vmatpush1.bf16.msra.mxu0 %v2946
  %2991 = vmatprep.subr.bf16.mxu0 0
  %2992 = vmatpush1.bf16.msra.mxu0 %v2947
  %2993 = vmatprep.subr.bf16.mxu0 0
  %2994 = vmatpush1.bf16.msra.mxu0 %v2948
  %2995 = vmatprep.subr.bf16.mxu0 0
  %2996 = vmatpush1.bf16.msra.mxu0 %v2949
  %2997 = vmatprep.subr.bf16.mxu0 0
  %2998 = vmatpush1.bf16.msra.mxu0 %v2950
  %2999 = vmatprep.mubr.bf16.mxu0 %v2870
  %3000 = vmatmul.mubr.bf16.gmra.mrb[0].mxu0 %v2869
  %v3001 = vpop.f32.mrb[0].mxu0
  %v3002 = vadd.f32 %v2868, %v3001
  %v3003 = vpop.f32.mrb[0].mxu0
  %v3004 = vpop.f32.mrb[0].mxu0
  %v3005 = vpop.f32.mrb[0].mxu0
  %3006 = vdwg.mxu0
  %v3007 = vmul.f32 %v3002, 0.2
  %v3008 = vmax.f32 %v3002, %v3007
  %v3009 = vld [vmem:[%s1 + $0x13c0] sm:$0xf]
  %v3010 = vld [vmem:[%s1 + $0x13d0] sm:$0xf]
  %v3011 = vld [vmem:[%s1 + $0x13e0] sm:$0xf]
  %v3012 = vld [vmem:[%s1 + $0x13f0] sm:$0xf]
  %v3013 = vld [vmem:[%s1 + $0x1400] sm:$0xf]
  %v3014 = vld [vmem:[%s1 + $0x1410] sm:$0xf]
  %v3015 = vld [vmem:[%s1 + $0x1420] sm:$0xf]
  %v3016 = vld [vmem:[%s1 + $0x1430] sm:$0xf]
  %v3017 = vld [vmem:[%s1 + $0x1440] sm:$0xf]
  %v3018 = vld [vmem:[%s1 + $0x1450] sm:$0xf]
  %v3019 = vld [vmem:[%s1 + $0x1460] sm:$0xf]
  %v3020 = vld [vmem:[%s1 + $0x1470] sm:$0xf]
  %v3021 = vld [vmem:[%s1 + $0x1480] sm:$0xf]
  %v3022 = vld [vmem:[%s1 + $0x1490] sm:$0xf]
  %v3023 = vld [vmem:[%s1 + $0x14a0] sm:$0xf]
  %v3024 = vld [vmem:[%s1 + $0x14b0] sm:$0xf]
  %v3025 = vld [vmem:[%s2 + $0x26] ss:$0 sm:$0xff]
  %v3026 = vpack.c.bf16 %v3008, %v3008
  %v3043 = vunpack.c.l.b16 %v3009
  %v3044 = vunpack.c.l.b16 %v3010
  %v3045 = vunpack.c.l.b16 %v3011
  %v3046 = vunpack.c.l.b16 %v3012
  %v3047 = vunpack.c.l.b16 %v3013
  %v3048 = vunpack.c.l.b16 %v3014
  %v3049 = vunpack.c.l.b16 %v3015
  %v3050 = vunpack.c.l.b16 %v3016
  %v3051 = vunpack.c.l.b16 %v3017
  %v3052 = vunpack.c.l.b16 %v3018
  %v3053 = vunpack.c.l.b16 %v3019
  %v3054 = vunpack.c.l.b16 %v3020
  %v3055 = vunpack.c.l.b16 %v3021
  %v3056 = vunpack.c.l.b16 %v3022
  %v3057 = vunpack.c.l.b16 %v3023
  %v3058 = vunpack.c.l.b16 %v3024
  %v3059 = vpack.c.b16 %v3044, %v3043
  %v3060 = vpack.c.b16 %v3046, %v3045
  %v3061 = vpack.c.b16 %v3048, %v3047
  %v3062 = vpack.c.b16 %v3050, %v3049
  %v3063 = vpack.c.b16 %v3052, %v3051
  %v3064 = vpack.c.b16 %v3054, %v3053
  %v3065 = vpack.c.b16 %v3056, %v3055
  %v3066 = vpack.c.b16 %v3058, %v3057
  %3075 = vmatprep.subr.bf16.mxu0 0
  %3076 = vmatpush1.bf16.msra.mxu0 %v3059
  %3077 = vmatprep.subr.bf16.mxu0 0
  %3078 = vmatpush1.bf16.msra.mxu0 %v3060
  %3079 = vmatprep.subr.bf16.mxu0 0
  %3080 = vmatpush1.bf16.msra.mxu0 %v3061
  %3081 = vmatprep.subr.bf16.mxu0 0
  %3082 = vmatpush1.bf16.msra.mxu0 %v3062
  %3083 = vmatprep.subr.bf16.mxu0 0
  %3084 = vmatpush1.bf16.msra.mxu0 %v3063
  %3085 = vmatprep.subr.bf16.mxu0 0
  %3086 = vmatpush1.bf16.msra.mxu0 %v3064
  %3087 = vmatprep.subr.bf16.mxu0 0
  %3088 = vmatpush1.bf16.msra.mxu0 %v3065
  %3089 = vmatprep.subr.bf16.mxu0 0
  %3090 = vmatpush1.bf16.msra.mxu0 %v3066
  %3091 = vmatprep.subr.bf16.mxu0 0
  %3092 = vmatpush1.bf16.msra.mxu0 0
  %3093 = vmatprep.subr.bf16.mxu0 0
  %3094 = vmatpush1.bf16.msra.mxu0 0
  %3095 = vmatprep.subr.bf16.mxu0 0
  %3096 = vmatpush1.bf16.msra.mxu0 0
  %3097 = vmatprep.subr.bf16.mxu0 0
  %3098 = vmatpush1.bf16.msra.mxu0 0
  %3099 = vmatprep.subr.bf16.mxu0 0
  %3100 = vmatpush1.bf16.msra.mxu0 0
  %3101 = vmatprep.subr.bf16.mxu0 0
  %3102 = vmatpush1.bf16.msra.mxu0 0
  %3103 = vmatprep.subr.bf16.mxu0 0
  %3104 = vmatpush1.bf16.msra.mxu0 0
  %3105 = vmatprep.subr.bf16.mxu0 0
  %3106 = vmatpush1.bf16.msra.mxu0 0
  %3107 = vmatprep.mubr.bf16.mxu0 0
  %3108 = vmatmul.mubr.bf16.gmra.mrb[0].mxu0 %v3026
  %v3109 = vpop.f32.mrb[0].mxu0
  %v3110 = vadd.f32 %v3025, %v3109
  %v3111 = vpop.f32.mrb[0].mxu0
  %v3112 = vpop.f32.mrb[0].mxu0
  %v3113 = vpop.f32.mrb[0].mxu0
  %3114 = vdwg.mxu0
  %v3115 = vmul.f32 %v3110, 0.2
  %v3116 = vmax.f32 %v3110, %v3115
  %v3117 = vld [vmem:[%s1 + $0x14c0] sm:$0xf]
  %v3118 = vld [vmem:[%s1 + $0x14d0] sm:$0xf]
  %v3119 = vld [vmem:[%s1 + $0x14e0] sm:$0xf]
  %v3120 = vld [vmem:[%s1 + $0x14f0] sm:$0xf]
  %v3121 = vld [vmem:[%s1 + $0x1500] sm:$0xf]
  %v3122 = vld [vmem:[%s1 + $0x1510] sm:$0xf]
  %v3123 = vld [vmem:[%s1 + $0x1520] sm:$0xf]
  %v3124 = vld [vmem:[%s1 + $0x1530] sm:$0xf]
  %v3125 = vld [vmem:[%s2 + $0x27] ss:$0 sm:$0xff]
  %v3126 = vpack.c.bf16 %v3116, %v3116
  %v3135 = vunpack.c.l.b16 %v3117
  %v3136 = vunpack.c.l.b16 %v3118
  %v3137 = vunpack.c.l.b16 %v3119
  %v3138 = vunpack.c.l.b16 %v3120
  %v3139 = vunpack.c.l.b16 %v3121
  %v3140 = vunpack.c.l.b16 %v3122
  %v3141 = vunpack.c.l.b16 %v3123
  %v3142 = vunpack.c.l.b16 %v3124
  %v3143 = vpack.c.b16 %v3136, %v3135
  %v3144 = vpack.c.b16 %v3138, %v3137
  %v3145 = vpack.c.b16 %v3140, %v3139
  %v3146 = vpack.c.b16 %v3142, %v3141
  %v3152 = vsel %vm1319, %v3126, 0
  %3154 = vmatprep.subr.bf16.mxu0 0
  %3155 = vmatpush1.bf16.msra.mxu0 %v3143
  %3156 = vmatprep.subr.bf16.mxu0 0
  %3157 = vmatpush1.bf16.msra.mxu0 %v3144
  %3158 = vmatprep.subr.bf16.mxu0 0
  %3159 = vmatpush1.bf16.msra.mxu0 %v3145
  %3160 = vmatprep.subr.bf16.mxu0 0
  %3161 = vmatpush1.bf16.msra.mxu0 %v3146
  %3162 = vmatprep.subr.bf16.mxu0 0
  %3163 = vmatpush1.bf16.msra.mxu0 0
  %3164 = vmatprep.subr.bf16.mxu0 0
  %3165 = vmatpush1.bf16.msra.mxu0 0
  %3166 = vmatprep.subr.bf16.mxu0 0
  %3167 = vmatpush1.bf16.msra.mxu0 0
  %3168 = vmatprep.subr.bf16.mxu0 0
  %3169 = vmatpush1.bf16.msra.mxu0 0
  %3170 = vmatprep.subr.bf16.mxu0 0
  %3171 = vmatpush1.bf16.msra.mxu0 0
  %3172 = vmatprep.subr.bf16.mxu0 0
  %3173 = vmatpush1.bf16.msra.mxu0 0
  %3174 = vmatprep.subr.bf16.mxu0 0
  %3175 = vmatpush1.bf16.msra.mxu0 0
  %3176 = vmatprep.subr.bf16.mxu0 0
  %3177 = vmatpush1.bf16.msra.mxu0 0
  %3178 = vmatprep.subr.bf16.mxu0 0
  %3179 = vmatpush1.bf16.msra.mxu0 0
  %3180 = vmatprep.subr.bf16.mxu0 0
  %3181 = vmatpush1.bf16.msra.mxu0 0
  %3182 = vmatprep.subr.bf16.mxu0 0
  %3183 = vmatpush1.bf16.msra.mxu0 0
  %3184 = vmatprep.subr.bf16.mxu0 0
  %3185 = vmatpush1.bf16.msra.mxu0 0
  %3186 = vmatprep.mubr.bf16.mxu0 0
  %3187 = vmatmul.mubr.bf16.gmra.mrb[0].mxu0 %v3152
  %v3188 = vpop.f32.mrb[0].mxu0
  %v3189 = vadd.f32 %v3125, %v3188
  %v3190 = vpop.f32.mrb[0].mxu0
  %v3191 = vpop.f32.mrb[0].mxu0
  %v3192 = vpop.f32.mrb[0].mxu0
  %3193 = vdwg.mxu0
  %3194 = vst [vmem:[%s4] sm:$0xff] %v3189
  // Predicated region
  $region14: #{autoencoder_forward.1} parent=0 // pred_check
    _
  $region15: #{autoencoder_forward.1} parent=0 // pred_check_branch
    %3196 = sbr.rel (0) target = $region17
  $region16: #{autoencoder_forward.1} parent=0 // pred_region
    _
  $region17: #{autoencoder_forward.1} parent=0 // pred_fallthru
    _
  // Predicated region
  $region18: #{autoencoder_forward.1} parent=0 // pred_check
    _
  $region19: #{autoencoder_forward.1} parent=0 // pred_check_branch
    %3198 = sbr.rel (0) target = $region21
  $region20: #{autoencoder_forward.1} parent=0 // pred_region
    _
  $region21: #{autoencoder_forward.1} parent=0 // pred_fallthru
    _
  // Predicated region
  $region22: #{autoencoder_forward.1} parent=0 // pred_check
    _
  $region23: #{autoencoder_forward.1} parent=0 // pred_check_branch
    %3200 = sbr.rel (0) target = $region25
  $region24: #{autoencoder_forward.1} parent=0 // pred_region
    _
  $region25: #{autoencoder_forward.1} parent=0 // pred_fallthru
    _
  // Predicated region
  $region26: #{autoencoder_forward.1} parent=0 // pred_check
    _
  $region27: #{autoencoder_forward.1} parent=0 // pred_check_branch
    %3202 = sbr.rel (0) target = $region29
  $region28: #{autoencoder_forward.1} parent=0 // pred_region
    _
  $region29: #{autoencoder_forward.1} parent=0 // pred_fallthru
    _

</llo_original>
